<compile_context>
chip_gen: v7x
topology: tpu7x:2x2x1
jax: 0.10.0
libtpu: 0.0.40
codegen_flags: <defaults>
</compile_context>

<pallas_src>
import functools

import jax
import jax.numpy as jnp
import numpy as np
from jax import lax
from jax.experimental import pallas as pl
from jax.experimental.pallas import tpu as pltpu


def _round_up(x, m):
    return (x + m - 1) // m * m


# ------------------------------ fused model kernel ------------------------------
def _fused_lstm_kernel(num_layers, T, BB, H, x_ref, *refs):
    """One batch chunk of BB rows, all layers, all T steps.

    Inputs : x_ref (T*BB, DinP) bf16 (time-major within the chunk);
             per layer: W_ih^T (K, Gp) bf16, W_hh^T (H, Gp) bf16, bias (1, Gp) f32;
             fc_w^T (H, Cp) bf16; fc_b (1, Cp) f32.
    Output : logits (BB, Cp) f32.
    Scratch: gates (T*BB, Gp) f32, inter-layer h sequence (T*BB, H) f32.
    """
    layer_refs = [refs[3 * l: 3 * l + 3] for l in range(num_layers)]
    fc_w_ref = refs[3 * num_layers]
    fc_b_ref = refs[3 * num_layers + 1]
    out_ref = refs[3 * num_layers + 2]
    gates_scr = refs[3 * num_layers + 3]
    hseq_scr = refs[3 * num_layers + 4]

    h_last = None
    for l, (wih_ref, whh_ref, b_ref) in enumerate(layer_refs):
        # ---- hoisted input projection: one big MXU matmul over all T steps ----
        xin = x_ref[...] if l == 0 else hseq_scr[...].astype(jnp.bfloat16)
        gates_scr[...] = (jnp.dot(xin, wih_ref[...],
                                  preferred_element_type=jnp.float32)
                          + b_ref[...])                          # (T*BB, Gp) f32

        whh = whh_ref[...]                                       # (H, Gp) bf16
        store_h = (l != num_layers - 1)   # only non-final layers feed a next layer

        def step(t, carry, whh=whh, store_h=store_h):
            h, c = carry                                         # f32 (BB, H)
            row = pl.multiple_of(t * BB, BB)                     # sublane-aligned
            g = gates_scr[pl.ds(row, BB), :] + jnp.dot(
                h.astype(jnp.bfloat16), whh,
                preferred_element_type=jnp.float32)              # (BB, Gp) f32
            # packed PyTorch gate order (i, f, g, o); f32 gate math (v5e-safe)
            sg = jax.nn.sigmoid(g)                               # one EUP slab pass
            i_g = sg[:, 0 * H:1 * H]
            f_g = sg[:, 1 * H:2 * H]
            o_g = sg[:, 3 * H:4 * H]
            g_g = jnp.tanh(g[:, 2 * H:3 * H])
            c_new = f_g * c + i_g * g_g
            h_new = o_g * jnp.tanh(c_new)
            if store_h:
                hseq_scr[pl.ds(row, BB), :] = h_new
            return (h_new, c_new)

        zeros = jnp.zeros((BB, H), jnp.float32)
        h_last, _ = lax.fori_loop(0, T, step, (zeros, zeros),
                                  unroll=True if T <= 64 else 8)

    # dropout == identity (inference); FC head on the final layer's last hidden
    out_ref[...] = (jnp.dot(h_last.astype(jnp.bfloat16), fc_w_ref[...],
                            preferred_element_type=jnp.float32) + fc_b_ref[...])


# --------------------------------- full model -----------------------------------
@jax.jit
def lstm_model_forward(x_btd, params):
    """x_btd: (B, T, input_size) -> logits (B, NUM_CLASSES)."""
    B, T, Din = x_btd.shape
    H = params["lstm"][0][1].shape[0]          # W_hh^T is (H, 4H)
    C = params["fc_w_t"].shape[1]
    num_layers = len(params["lstm"])

    BB = min(_round_up(B, 8), 32)              # batch rows per grid step
    Bp = _round_up(B, BB)
    nb = Bp // BB                              # grid size (split across v7x TCs)
    DinP = _round_up(Din, 128)
    Gp = _round_up(4 * H, 128)                 # packed-gate lane width (pad at end)
    Cp = _round_up(C, 128)

    # time-major, padded, regrouped into nb contiguous batch chunks of BB rows
    x = jnp.transpose(x_btd, (1, 0, 2)).astype(jnp.float32)       # (T, B, Din)
    x = jnp.pad(x, ((0, 0), (0, Bp - B), (0, DinP - Din)))        # (T, Bp, DinP)
    x = (x.reshape(T, nb, BB, DinP).transpose(1, 0, 2, 3)
           .reshape(nb, T * BB, DinP).astype(jnp.bfloat16))

    flat_inputs = [x]
    in_specs = [pl.BlockSpec((None, T * BB, DinP), lambda i: (i, 0, 0))]

    def _const_spec(arr):                      # whole array, same block every step
        return pl.BlockSpec(arr.shape, lambda i: (0, 0))

    for l, (w_ih_t, w_hh_t, bias) in enumerate(params["lstm"]):
        in_dim = Din if l == 0 else H
        in_dim_p = DinP if l == 0 else H       # narrow K for layers >= 1
        wih = jnp.pad(w_ih_t.astype(jnp.float32),
                      ((0, in_dim_p - in_dim), (0, Gp - 4 * H))).astype(jnp.bfloat16)
        whh = jnp.pad(w_hh_t.astype(jnp.float32),
                      ((0, 0), (0, Gp - 4 * H))).astype(jnp.bfloat16)
        b = jnp.pad(bias.astype(jnp.float32).reshape(1, 4 * H),
                    ((0, 0), (0, Gp - 4 * H)))
        flat_inputs += [wih, whh, b]
        in_specs += [_const_spec(wih), _const_spec(whh), _const_spec(b)]

    fc_w = jnp.pad(params["fc_w_t"].astype(jnp.float32),
                   ((0, 0), (0, Cp - C))).astype(jnp.bfloat16)
    fc_b = jnp.pad(params["fc_b"].astype(jnp.float32).reshape(1, C),
                   ((0, 0), (0, Cp - C)))
    flat_inputs += [fc_w, fc_b]
    in_specs += [_const_spec(fc_w), _const_spec(fc_b)]

    kernel = functools.partial(_fused_lstm_kernel, num_layers, T, BB, H)

    out_padded = pl.pallas_call(
        kernel,
        out_shape=jax.ShapeDtypeStruct((Bp, Cp), jnp.float32),
        grid=(nb,),
        in_specs=in_specs,
        out_specs=pl.BlockSpec((BB, Cp), lambda i: (i, 0)),
        scratch_shapes=[
            pltpu.VMEM((T * BB, Gp), jnp.float32),   # hoisted input-proj gates
            pltpu.VMEM((T * BB, H), jnp.float32),    # inter-layer h sequence
        ],
        compiler_params=pltpu.CompilerParams(
            # batch chunks are independent -> split across v7x's two TensorCores
            dimension_semantics=("parallel",),
            # whole model (bf16 weights + f32 scratch) is well under 1 MiB at
            # this config; explicit limit keeps headroom below v7x's 64 MiB
            # physical VMEM.  See TODO above for weight streaming at large H.
            vmem_limit_bytes=32 * 1024 * 1024),
    )(*flat_inputs)

    return out_padded[:B, :C]


# ------------------------------- parameter init ---------------------------------
def init_params(key, input_size, hidden_size, num_layers, num_classes):
    orth = jax.nn.initializers.orthogonal()
    layers = []
    for l in range(num_layers):
        d_in = input_size if l == 0 else hidden_size
        key, k1, k2 = jax.random.split(key, 3)
        w_ih = orth(k1, (4 * hidden_size, d_in), jnp.float32)   # PyTorch (4H, D)
        w_hh = orth(k2, (4 * hidden_size, hidden_size), jnp.float32)
        # b_ih + b_hh combined; forget-gate slice [H:2H] filled with 1 in each -> 2
        bias = jnp.zeros((4 * hidden_size,), jnp.float32)
        bias = bias.at[hidden_size:2 * hidden_size].set(2.0)
        layers.append((jnp.asarray(w_ih.T), jnp.asarray(w_hh.T), bias))
    key, kf = jax.random.split(key)
    fc_w = 0.01 * jax.random.normal(kf, (num_classes, hidden_size), jnp.float32)
    fc_b = jnp.zeros((num_classes,), jnp.float32)
    return {"lstm": layers, "fc_w_t": jnp.asarray(fc_w.T), "fc_b": fc_b}


# ------------------------------ pure-JAX reference -------------------------------
def reference_forward(x_btd, params, matmul_dtype=jnp.float32):
    """Pure-JAX reference.  matmul_dtype=bfloat16 mirrors the kernel's MXU
    operand precision (accumulation and gate math stay f32)."""
    T, B = x_btd.shape[1], x_btd.shape[0]
    h_seq = jnp.transpose(x_btd, (1, 0, 2)).astype(jnp.float32)   # (T, B, Din)
    for (w_ih_t, w_hh_t, bias) in params["lstm"]:
        H = w_hh_t.shape[0]
        wih = w_ih_t.astype(matmul_dtype)
        whh = w_hh_t.astype(matmul_dtype)
        flat = h_seq.reshape(T * B, -1).astype(matmul_dtype)
        gates_in = (jnp.dot(flat, wih, preferred_element_type=jnp.float32)
                    .reshape(T, B, -1) + bias)                    # hoisted, f32

        def step(carry, g_in):
            h, c = carry
            g = g_in + jnp.dot(h.astype(matmul_dtype), whh,
                               preferred_element_type=jnp.float32)
            i = jax.nn.sigmoid(g[:, :H])
            f = jax.nn.sigmoid(g[:, H:2 * H])
            gg = jnp.tanh(g[:, 2 * H:3 * H])
            o = jax.nn.sigmoid(g[:, 3 * H:])
            c = f * c + i * gg
            h = o * jnp.tanh(c)
            return (h, c), h

        init = (jnp.zeros((B, H), jnp.float32), jnp.zeros((B, H), jnp.float32))
        _, h_seq = jax.lax.scan(step, init, gates_in)
    return (jnp.dot(h_seq[-1].astype(matmul_dtype),
                    params["fc_w_t"].astype(matmul_dtype),
                    preferred_element_type=jnp.float32) + params["fc_b"])


if __name__ == "__main__":
    # config: input_size=16, hidden_size=32, num_layers=2, dropout=0.0, NUM_CLASSES=5
    B, T, INPUT, HIDDEN, LAYERS, CLASSES = 2, 8, 16, 32, 2, 5

    key = jax.random.PRNGKey(0)
    kx, kp = jax.random.split(key)
    x = jax.random.normal(kx, (B, T, INPUT), jnp.float32)
    params = init_params(kp, INPUT, HIDDEN, LAYERS, CLASSES)

    out = jax.block_until_ready(lstm_model_forward(x, params))
    assert out.shape == (B, CLASSES)

    # tight check vs a reference that mirrors the kernel's bf16 MXU-operand policy
    ref_bf16 = jax.block_until_ready(
        reference_forward(x, params, matmul_dtype=jnp.bfloat16))
    np.testing.assert_allclose(np.asarray(out), np.asarray(ref_bf16),
                               rtol=1e-2, atol=1e-3)

    # loose check vs the pure-f32 reference (original module semantics)
    ref_f32 = jax.block_until_ready(reference_forward(x, params))
    np.testing.assert_allclose(np.asarray(out), np.asarray(ref_f32),
                               rtol=1e-1, atol=2e-2)

    print("KERNEL_OK")
</pallas_src>

<mosaic_0001>
module attributes {stable_mosaic.version = 11 : i64} {
  func.func @_fused_lstm_kernel(%arg0: i32, %arg1: memref<1x64x128xbf16, #tpu.memory_space<vmem>>, %arg2: memref<128x128xbf16, #tpu.memory_space<vmem>>, %arg3: memref<32x128xbf16, #tpu.memory_space<vmem>>, %arg4: memref<1x128xf32, #tpu.memory_space<vmem>>, %arg5: memref<32x128xbf16, #tpu.memory_space<vmem>>, %arg6: memref<32x128xbf16, #tpu.memory_space<vmem>>, %arg7: memref<1x128xf32, #tpu.memory_space<vmem>>, %arg8: memref<32x128xbf16, #tpu.memory_space<vmem>>, %arg9: memref<1x128xf32, #tpu.memory_space<vmem>>, %arg10: memref<8x128xf32, #tpu.memory_space<vmem>>, %arg11: memref<64x128xf32, #tpu.memory_space<vmem>>, %arg12: memref<64x32xf32, #tpu.memory_space<vmem>>) attributes {dimension_semantics = [#tpu.dimension_semantics<parallel>], iteration_bounds = array<i64: 1>, scalar_prefetch = 0 : i64, scratch_operands = 2 : i64, tpu.core_type = #tpu.core_type<tc>, window_params = [{transform_indices = @transform_0, window_bounds = array<i64: 1, 64, 128>}, {pipeline_mode = #tpu.pipeline_mode<synchronous>, transform_indices = @transform_1, window_bounds = array<i64: 128, 128>}, {pipeline_mode = #tpu.pipeline_mode<synchronous>, transform_indices = @transform_2, window_bounds = array<i64: 32, 128>}, {pipeline_mode = #tpu.pipeline_mode<synchronous>, transform_indices = @transform_3, window_bounds = array<i64: 1, 128>}, {pipeline_mode = #tpu.pipeline_mode<synchronous>, transform_indices = @transform_4, window_bounds = array<i64: 32, 128>}, {pipeline_mode = #tpu.pipeline_mode<synchronous>, transform_indices = @transform_5, window_bounds = array<i64: 32, 128>}, {pipeline_mode = #tpu.pipeline_mode<synchronous>, transform_indices = @transform_6, window_bounds = array<i64: 1, 128>}, {pipeline_mode = #tpu.pipeline_mode<synchronous>, transform_indices = @transform_7, window_bounds = array<i64: 32, 128>}, {pipeline_mode = #tpu.pipeline_mode<synchronous>, transform_indices = @transform_8, window_bounds = array<i64: 1, 128>}, {transform_indices = @transform_9, window_bounds = array<i64: 8, 128>}]} {
    %c0 = arith.constant 0 : index
    %c0_0 = arith.constant 0 : index
    %c0_1 = arith.constant 0 : index
    %0 = vector.load %arg1[%c0, %c0_0, %c0_1] : memref<1x64x128xbf16, #tpu.memory_space<vmem>>, vector<1x64x128xbf16>
    %1 = vector.shape_cast %0 : vector<1x64x128xbf16> to vector<64x128xbf16>
    %c0_2 = arith.constant 0 : index
    %c0_3 = arith.constant 0 : index
    %2 = vector.load %arg2[%c0_2, %c0_3] : memref<128x128xbf16, #tpu.memory_space<vmem>>, vector<128x128xbf16>
    %cst = arith.constant dense<0.000000e+00> : vector<64x128xf32>
    %3 = tpu.matmul %1, %2, %cst {dimension_numbers = #tpu.dot_dimension_numbers<[1], [0], [0], [1], [0, 0, 1, 1], [], []>} : vector<64x128xbf16>, vector<128x128xbf16>, vector<64x128xf32> -> vector<64x128xf32>
    %c0_4 = arith.constant 0 : index
    %c0_5 = arith.constant 0 : index
    %4 = vector.load %arg4[%c0_4, %c0_5] : memref<1x128xf32, #tpu.memory_space<vmem>>, vector<1x128xf32>
    %5 = vector.broadcast %4 : vector<1x128xf32> to vector<64x128xf32>
    %6 = arith.addf %3, %5 : vector<64x128xf32>
    %c0_6 = arith.constant 0 : index
    %c0_7 = arith.constant 0 : index
    %7 = vector.load %arg11[%c0_6, %c0_7] : memref<64x128xf32, #tpu.memory_space<vmem>>, vector<64x128xf32>
    tpu.vector_store %arg11[%c0_6, %c0_7], %6 {strides = array<i32>} : memref<64x128xf32, #tpu.memory_space<vmem>>, vector<64x128xf32>,
    %c0_8 = arith.constant 0 : index
    %c0_9 = arith.constant 0 : index
    %8 = vector.load %arg3[%c0_8, %c0_9] : memref<32x128xbf16, #tpu.memory_space<vmem>>, vector<32x128xbf16>
    %cst_10 = arith.constant 0.000000e+00 : f32
    %9 = vector.broadcast %cst_10 : f32 to vector<8x32xf32>
    %c0_i32 = arith.constant 0 : i32
    %c8_i32 = arith.constant 8 : i32
    %10 = arith.muli %c0_i32, %c8_i32 : i32
    %11 = tpu.assume_multiple %10, 8 : i32
    %12 = arith.index_cast %11 : i32 to index
    %c0_11 = arith.constant 0 : index
    %13 = vector.load %arg11[%12, %c0_11] : memref<64x128xf32, #tpu.memory_space<vmem>>, vector<8x128xf32>
    %14 = arith.truncf %9 : vector<8x32xf32> to vector<8x32xbf16>
    %cst_12 = arith.constant dense<0.000000e+00> : vector<8x128xf32>
    %15 = tpu.matmul %14, %8, %cst_12 {dimension_numbers = #tpu.dot_dimension_numbers<[1], [0], [0], [1], [0, 0, 1, 1], [], []>} : vector<8x32xbf16>, vector<32x128xbf16>, vector<8x128xf32> -> vector<8x128xf32>
    %16 = arith.addf %13, %15 : vector<8x128xf32>
    %17 = arith.negf %16 : vector<8x128xf32>
    %18 = math.exp %17 : vector<8x128xf32>
    %cst_13 = arith.constant 1.000000e+00 : f32
    %19 = vector.broadcast %cst_13 : f32 to vector<8x128xf32>
    %20 = arith.addf %19, %18 : vector<8x128xf32>
    %21 = arith.divf %19, %20 : vector<8x128xf32>
    %22 = vector.extract_strided_slice %21 {offsets = [0, 0], sizes = [8, 32], strides = [1, 1]} : vector<8x128xf32> to vector<8x32xf32>
    %23 = vector.extract_strided_slice %21 {offsets = [0, 32], sizes = [8, 32], strides = [1, 1]} : vector<8x128xf32> to vector<8x32xf32>
    %24 = vector.extract_strided_slice %21 {offsets = [0, 96], sizes = [8, 32], strides = [1, 1]} : vector<8x128xf32> to vector<8x32xf32>
    %25 = vector.extract_strided_slice %16 {offsets = [0, 64], sizes = [8, 32], strides = [1, 1]} : vector<8x128xf32> to vector<8x32xf32>
    %26 = math.tanh %25 : vector<8x32xf32>
    %27 = arith.mulf %23, %9 : vector<8x32xf32>
    %28 = arith.mulf %22, %26 : vector<8x32xf32>
    %29 = arith.addf %27, %28 : vector<8x32xf32>
    %30 = math.tanh %29 : vector<8x32xf32>
    %31 = arith.mulf %24, %30 : vector<8x32xf32>
    %32 = arith.index_cast %11 : i32 to index
    %c0_14 = arith.constant 0 : index
    %33 = vector.load %arg12[%32, %c0_14] : memref<64x32xf32, #tpu.memory_space<vmem>>, vector<8x32xf32>
    tpu.vector_store %arg12[%32, %c0_14], %31 {strides = array<i32>} : memref<64x32xf32, #tpu.memory_space<vmem>>, vector<8x32xf32>,
    %c1_i32 = arith.constant 1 : i32
    %c8_i32_15 = arith.constant 8 : i32
    %34 = arith.muli %c1_i32, %c8_i32_15 : i32
    %35 = tpu.assume_multiple %34, 8 : i32
    %36 = arith.index_cast %35 : i32 to index
    %c0_16 = arith.constant 0 : index
    %37 = vector.load %arg11[%36, %c0_16] : memref<64x128xf32, #tpu.memory_space<vmem>>, vector<8x128xf32>
    %38 = arith.truncf %31 : vector<8x32xf32> to vector<8x32xbf16>
    %cst_17 = arith.constant dense<0.000000e+00> : vector<8x128xf32>
    %39 = tpu.matmul %38, %8, %cst_17 {dimension_numbers = #tpu.dot_dimension_numbers<[1], [0], [0], [1], [0, 0, 1, 1], [], []>} : vector<8x32xbf16>, vector<32x128xbf16>, vector<8x128xf32> -> vector<8x128xf32>
    %40 = arith.addf %37, %39 : vector<8x128xf32>
    %41 = arith.negf %40 : vector<8x128xf32>
    %42 = math.exp %41 : vector<8x128xf32>
    %cst_18 = arith.constant 1.000000e+00 : f32
    %43 = vector.broadcast %cst_18 : f32 to vector<8x128xf32>
    %44 = arith.addf %43, %42 : vector<8x128xf32>
    %45 = arith.divf %43, %44 : vector<8x128xf32>
    %46 = vector.extract_strided_slice %45 {offsets = [0, 0], sizes = [8, 32], strides = [1, 1]} : vector<8x128xf32> to vector<8x32xf32>
    %47 = vector.extract_strided_slice %45 {offsets = [0, 32], sizes = [8, 32], strides = [1, 1]} : vector<8x128xf32> to vector<8x32xf32>
    %48 = vector.extract_strided_slice %45 {offsets = [0, 96], sizes = [8, 32], strides = [1, 1]} : vector<8x128xf32> to vector<8x32xf32>
    %49 = vector.extract_strided_slice %40 {offsets = [0, 64], sizes = [8, 32], strides = [1, 1]} : vector<8x128xf32> to vector<8x32xf32>
    %50 = math.tanh %49 : vector<8x32xf32>
    %51 = arith.mulf %47, %29 : vector<8x32xf32>
    %52 = arith.mulf %46, %50 : vector<8x32xf32>
    %53 = arith.addf %51, %52 : vector<8x32xf32>
    %54 = math.tanh %53 : vector<8x32xf32>
    %55 = arith.mulf %48, %54 : vector<8x32xf32>
    %56 = arith.index_cast %35 : i32 to index
    %c0_19 = arith.constant 0 : index
    %57 = vector.load %arg12[%56, %c0_19] : memref<64x32xf32, #tpu.memory_space<vmem>>, vector<8x32xf32>
    tpu.vector_store %arg12[%56, %c0_19], %55 {strides = array<i32>} : memref<64x32xf32, #tpu.memory_space<vmem>>, vector<8x32xf32>,
    %c2_i32 = arith.constant 2 : i32
    %c8_i32_20 = arith.constant 8 : i32
    %58 = arith.muli %c2_i32, %c8_i32_20 : i32
    %59 = tpu.assume_multiple %58, 8 : i32
    %60 = arith.index_cast %59 : i32 to index
    %c0_21 = arith.constant 0 : index
    %61 = vector.load %arg11[%60, %c0_21] : memref<64x128xf32, #tpu.memory_space<vmem>>, vector<8x128xf32>
    %62 = arith.truncf %55 : vector<8x32xf32> to vector<8x32xbf16>
    %cst_22 = arith.constant dense<0.000000e+00> : vector<8x128xf32>
    %63 = tpu.matmul %62, %8, %cst_22 {dimension_numbers = #tpu.dot_dimension_numbers<[1], [0], [0], [1], [0, 0, 1, 1], [], []>} : vector<8x32xbf16>, vector<32x128xbf16>, vector<8x128xf32> -> vector<8x128xf32>
    %64 = arith.addf %61, %63 : vector<8x128xf32>
    %65 = arith.negf %64 : vector<8x128xf32>
    %66 = math.exp %65 : vector<8x128xf32>
    %cst_23 = arith.constant 1.000000e+00 : f32
    %67 = vector.broadcast %cst_23 : f32 to vector<8x128xf32>
    %68 = arith.addf %67, %66 : vector<8x128xf32>
    %69 = arith.divf %67, %68 : vector<8x128xf32>
    %70 = vector.extract_strided_slice %69 {offsets = [0, 0], sizes = [8, 32], strides = [1, 1]} : vector<8x128xf32> to vector<8x32xf32>
    %71 = vector.extract_strided_slice %69 {offsets = [0, 32], sizes = [8, 32], strides = [1, 1]} : vector<8x128xf32> to vector<8x32xf32>
    %72 = vector.extract_strided_slice %69 {offsets = [0, 96], sizes = [8, 32], strides = [1, 1]} : vector<8x128xf32> to vector<8x32xf32>
    %73 = vector.extract_strided_slice %64 {offsets = [0, 64], sizes = [8, 32], strides = [1, 1]} : vector<8x128xf32> to vector<8x32xf32>
    %74 = math.tanh %73 : vector<8x32xf32>
    %75 = arith.mulf %71, %53 : vector<8x32xf32>
    %76 = arith.mulf %70, %74 : vector<8x32xf32>
    %77 = arith.addf %75, %76 : vector<8x32xf32>
    %78 = math.tanh %77 : vector<8x32xf32>
    %79 = arith.mulf %72, %78 : vector<8x32xf32>
    %80 = arith.index_cast %59 : i32 to index
    %c0_24 = arith.constant 0 : index
    %81 = vector.load %arg12[%80, %c0_24] : memref<64x32xf32, #tpu.memory_space<vmem>>, vector<8x32xf32>
    tpu.vector_store %arg12[%80, %c0_24], %79 {strides = array<i32>} : memref<64x32xf32, #tpu.memory_space<vmem>>, vector<8x32xf32>,
    %c3_i32 = arith.constant 3 : i32
    %c8_i32_25 = arith.constant 8 : i32
    %82 = arith.muli %c3_i32, %c8_i32_25 : i32
    %83 = tpu.assume_multiple %82, 8 : i32
    %84 = arith.index_cast %83 : i32 to index
    %c0_26 = arith.constant 0 : index
    %85 = vector.load %arg11[%84, %c0_26] : memref<64x128xf32, #tpu.memory_space<vmem>>, vector<8x128xf32>
    %86 = arith.truncf %79 : vector<8x32xf32> to vector<8x32xbf16>
    %cst_27 = arith.constant dense<0.000000e+00> : vector<8x128xf32>
    %87 = tpu.matmul %86, %8, %cst_27 {dimension_numbers = #tpu.dot_dimension_numbers<[1], [0], [0], [1], [0, 0, 1, 1], [], []>} : vector<8x32xbf16>, vector<32x128xbf16>, vector<8x128xf32> -> vector<8x128xf32>
    %88 = arith.addf %85, %87 : vector<8x128xf32>
    %89 = arith.negf %88 : vector<8x128xf32>
    %90 = math.exp %89 : vector<8x128xf32>
    %cst_28 = arith.constant 1.000000e+00 : f32
    %91 = vector.broadcast %cst_28 : f32 to vector<8x128xf32>
    %92 = arith.addf %91, %90 : vector<8x128xf32>
    %93 = arith.divf %91, %92 : vector<8x128xf32>
    %94 = vector.extract_strided_slice %93 {offsets = [0, 0], sizes = [8, 32], strides = [1, 1]} : vector<8x128xf32> to vector<8x32xf32>
    %95 = vector.extract_strided_slice %93 {offsets = [0, 32], sizes = [8, 32], strides = [1, 1]} : vector<8x128xf32> to vector<8x32xf32>
    %96 = vector.extract_strided_slice %93 {offsets = [0, 96], sizes = [8, 32], strides = [1, 1]} : vector<8x128xf32> to vector<8x32xf32>
    %97 = vector.extract_strided_slice %88 {offsets = [0, 64], sizes = [8, 32], strides = [1, 1]} : vector<8x128xf32> to vector<8x32xf32>
    %98 = math.tanh %97 : vector<8x32xf32>
    %99 = arith.mulf %95, %77 : vector<8x32xf32>
    %100 = arith.mulf %94, %98 : vector<8x32xf32>
    %101 = arith.addf %99, %100 : vector<8x32xf32>
    %102 = math.tanh %101 : vector<8x32xf32>
    %103 = arith.mulf %96, %102 : vector<8x32xf32>
    %104 = arith.index_cast %83 : i32 to index
    %c0_29 = arith.constant 0 : index
    %105 = vector.load %arg12[%104, %c0_29] : memref<64x32xf32, #tpu.memory_space<vmem>>, vector<8x32xf32>
    tpu.vector_store %arg12[%104, %c0_29], %103 {strides = array<i32>} : memref<64x32xf32, #tpu.memory_space<vmem>>, vector<8x32xf32>,
    %c4_i32 = arith.constant 4 : i32
    %c8_i32_30 = arith.constant 8 : i32
    %106 = arith.muli %c4_i32, %c8_i32_30 : i32
    %107 = tpu.assume_multiple %106, 8 : i32
    %108 = arith.index_cast %107 : i32 to index
    %c0_31 = arith.constant 0 : index
    %109 = vector.load %arg11[%108, %c0_31] : memref<64x128xf32, #tpu.memory_space<vmem>>, vector<8x128xf32>
    %110 = arith.truncf %103 : vector<8x32xf32> to vector<8x32xbf16>
    %cst_32 = arith.constant dense<0.000000e+00> : vector<8x128xf32>
    %111 = tpu.matmul %110, %8, %cst_32 {dimension_numbers = #tpu.dot_dimension_numbers<[1], [0], [0], [1], [0, 0, 1, 1], [], []>} : vector<8x32xbf16>, vector<32x128xbf16>, vector<8x128xf32> -> vector<8x128xf32>
    %112 = arith.addf %109, %111 : vector<8x128xf32>
    %113 = arith.negf %112 : vector<8x128xf32>
    %114 = math.exp %113 : vector<8x128xf32>
    %cst_33 = arith.constant 1.000000e+00 : f32
    %115 = vector.broadcast %cst_33 : f32 to vector<8x128xf32>
    %116 = arith.addf %115, %114 : vector<8x128xf32>
    %117 = arith.divf %115, %116 : vector<8x128xf32>
    %118 = vector.extract_strided_slice %117 {offsets = [0, 0], sizes = [8, 32], strides = [1, 1]} : vector<8x128xf32> to vector<8x32xf32>
    %119 = vector.extract_strided_slice %117 {offsets = [0, 32], sizes = [8, 32], strides = [1, 1]} : vector<8x128xf32> to vector<8x32xf32>
    %120 = vector.extract_strided_slice %117 {offsets = [0, 96], sizes = [8, 32], strides = [1, 1]} : vector<8x128xf32> to vector<8x32xf32>
    %121 = vector.extract_strided_slice %112 {offsets = [0, 64], sizes = [8, 32], strides = [1, 1]} : vector<8x128xf32> to vector<8x32xf32>
    %122 = math.tanh %121 : vector<8x32xf32>
    %123 = arith.mulf %119, %101 : vector<8x32xf32>
    %124 = arith.mulf %118, %122 : vector<8x32xf32>
    %125 = arith.addf %123, %124 : vector<8x32xf32>
    %126 = math.tanh %125 : vector<8x32xf32>
    %127 = arith.mulf %120, %126 : vector<8x32xf32>
    %128 = arith.index_cast %107 : i32 to index
    %c0_34 = arith.constant 0 : index
    %129 = vector.load %arg12[%128, %c0_34] : memref<64x32xf32, #tpu.memory_space<vmem>>, vector<8x32xf32>
    tpu.vector_store %arg12[%128, %c0_34], %127 {strides = array<i32>} : memref<64x32xf32, #tpu.memory_space<vmem>>, vector<8x32xf32>,
    %c5_i32 = arith.constant 5 : i32
    %c8_i32_35 = arith.constant 8 : i32
    %130 = arith.muli %c5_i32, %c8_i32_35 : i32
    %131 = tpu.assume_multiple %130, 8 : i32
    %132 = arith.index_cast %131 : i32 to index
    %c0_36 = arith.constant 0 : index
    %133 = vector.load %arg11[%132, %c0_36] : memref<64x128xf32, #tpu.memory_space<vmem>>, vector<8x128xf32>
    %134 = arith.truncf %127 : vector<8x32xf32> to vector<8x32xbf16>
    %cst_37 = arith.constant dense<0.000000e+00> : vector<8x128xf32>
    %135 = tpu.matmul %134, %8, %cst_37 {dimension_numbers = #tpu.dot_dimension_numbers<[1], [0], [0], [1], [0, 0, 1, 1], [], []>} : vector<8x32xbf16>, vector<32x128xbf16>, vector<8x128xf32> -> vector<8x128xf32>
    %136 = arith.addf %133, %135 : vector<8x128xf32>
    %137 = arith.negf %136 : vector<8x128xf32>
    %138 = math.exp %137 : vector<8x128xf32>
    %cst_38 = arith.constant 1.000000e+00 : f32
    %139 = vector.broadcast %cst_38 : f32 to vector<8x128xf32>
    %140 = arith.addf %139, %138 : vector<8x128xf32>
    %141 = arith.divf %139, %140 : vector<8x128xf32>
    %142 = vector.extract_strided_slice %141 {offsets = [0, 0], sizes = [8, 32], strides = [1, 1]} : vector<8x128xf32> to vector<8x32xf32>
    %143 = vector.extract_strided_slice %141 {offsets = [0, 32], sizes = [8, 32], strides = [1, 1]} : vector<8x128xf32> to vector<8x32xf32>
    %144 = vector.extract_strided_slice %141 {offsets = [0, 96], sizes = [8, 32], strides = [1, 1]} : vector<8x128xf32> to vector<8x32xf32>
    %145 = vector.extract_strided_slice %136 {offsets = [0, 64], sizes = [8, 32], strides = [1, 1]} : vector<8x128xf32> to vector<8x32xf32>
    %146 = math.tanh %145 : vector<8x32xf32>
    %147 = arith.mulf %143, %125 : vector<8x32xf32>
    %148 = arith.mulf %142, %146 : vector<8x32xf32>
    %149 = arith.addf %147, %148 : vector<8x32xf32>
    %150 = math.tanh %149 : vector<8x32xf32>
    %151 = arith.mulf %144, %150 : vector<8x32xf32>
    %152 = arith.index_cast %131 : i32 to index
    %c0_39 = arith.constant 0 : index
    %153 = vector.load %arg12[%152, %c0_39] : memref<64x32xf32, #tpu.memory_space<vmem>>, vector<8x32xf32>
    tpu.vector_store %arg12[%152, %c0_39], %151 {strides = array<i32>} : memref<64x32xf32, #tpu.memory_space<vmem>>, vector<8x32xf32>,
    %c6_i32 = arith.constant 6 : i32
    %c8_i32_40 = arith.constant 8 : i32
    %154 = arith.muli %c6_i32, %c8_i32_40 : i32
    %155 = tpu.assume_multiple %154, 8 : i32
    %156 = arith.index_cast %155 : i32 to index
    %c0_41 = arith.constant 0 : index
    %157 = vector.load %arg11[%156, %c0_41] : memref<64x128xf32, #tpu.memory_space<vmem>>, vector<8x128xf32>
    %158 = arith.truncf %151 : vector<8x32xf32> to vector<8x32xbf16>
    %cst_42 = arith.constant dense<0.000000e+00> : vector<8x128xf32>
    %159 = tpu.matmul %158, %8, %cst_42 {dimension_numbers = #tpu.dot_dimension_numbers<[1], [0], [0], [1], [0, 0, 1, 1], [], []>} : vector<8x32xbf16>, vector<32x128xbf16>, vector<8x128xf32> -> vector<8x128xf32>
    %160 = arith.addf %157, %159 : vector<8x128xf32>
    %161 = arith.negf %160 : vector<8x128xf32>
    %162 = math.exp %161 : vector<8x128xf32>
    %cst_43 = arith.constant 1.000000e+00 : f32
    %163 = vector.broadcast %cst_43 : f32 to vector<8x128xf32>
    %164 = arith.addf %163, %162 : vector<8x128xf32>
    %165 = arith.divf %163, %164 : vector<8x128xf32>
    %166 = vector.extract_strided_slice %165 {offsets = [0, 0], sizes = [8, 32], strides = [1, 1]} : vector<8x128xf32> to vector<8x32xf32>
    %167 = vector.extract_strided_slice %165 {offsets = [0, 32], sizes = [8, 32], strides = [1, 1]} : vector<8x128xf32> to vector<8x32xf32>
    %168 = vector.extract_strided_slice %165 {offsets = [0, 96], sizes = [8, 32], strides = [1, 1]} : vector<8x128xf32> to vector<8x32xf32>
    %169 = vector.extract_strided_slice %160 {offsets = [0, 64], sizes = [8, 32], strides = [1, 1]} : vector<8x128xf32> to vector<8x32xf32>
    %170 = math.tanh %169 : vector<8x32xf32>
    %171 = arith.mulf %167, %149 : vector<8x32xf32>
    %172 = arith.mulf %166, %170 : vector<8x32xf32>
    %173 = arith.addf %171, %172 : vector<8x32xf32>
    %174 = math.tanh %173 : vector<8x32xf32>
    %175 = arith.mulf %168, %174 : vector<8x32xf32>
    %176 = arith.index_cast %155 : i32 to index
    %c0_44 = arith.constant 0 : index
    %177 = vector.load %arg12[%176, %c0_44] : memref<64x32xf32, #tpu.memory_space<vmem>>, vector<8x32xf32>
    tpu.vector_store %arg12[%176, %c0_44], %175 {strides = array<i32>} : memref<64x32xf32, #tpu.memory_space<vmem>>, vector<8x32xf32>,
    %c7_i32 = arith.constant 7 : i32
    %c8_i32_45 = arith.constant 8 : i32
    %178 = arith.muli %c7_i32, %c8_i32_45 : i32
    %179 = tpu.assume_multiple %178, 8 : i32
    %180 = arith.index_cast %179 : i32 to index
    %c0_46 = arith.constant 0 : index
    %181 = vector.load %arg11[%180, %c0_46] : memref<64x128xf32, #tpu.memory_space<vmem>>, vector<8x128xf32>
    %182 = arith.truncf %175 : vector<8x32xf32> to vector<8x32xbf16>
    %cst_47 = arith.constant dense<0.000000e+00> : vector<8x128xf32>
    %183 = tpu.matmul %182, %8, %cst_47 {dimension_numbers = #tpu.dot_dimension_numbers<[1], [0], [0], [1], [0, 0, 1, 1], [], []>} : vector<8x32xbf16>, vector<32x128xbf16>, vector<8x128xf32> -> vector<8x128xf32>
    %184 = arith.addf %181, %183 : vector<8x128xf32>
    %185 = arith.negf %184 : vector<8x128xf32>
    %186 = math.exp %185 : vector<8x128xf32>
    %cst_48 = arith.constant 1.000000e+00 : f32
    %187 = vector.broadcast %cst_48 : f32 to vector<8x128xf32>
    %188 = arith.addf %187, %186 : vector<8x128xf32>
    %189 = arith.divf %187, %188 : vector<8x128xf32>
    %190 = vector.extract_strided_slice %189 {offsets = [0, 0], sizes = [8, 32], strides = [1, 1]} : vector<8x128xf32> to vector<8x32xf32>
    %191 = vector.extract_strided_slice %189 {offsets = [0, 32], sizes = [8, 32], strides = [1, 1]} : vector<8x128xf32> to vector<8x32xf32>
    %192 = vector.extract_strided_slice %189 {offsets = [0, 96], sizes = [8, 32], strides = [1, 1]} : vector<8x128xf32> to vector<8x32xf32>
    %193 = vector.extract_strided_slice %184 {offsets = [0, 64], sizes = [8, 32], strides = [1, 1]} : vector<8x128xf32> to vector<8x32xf32>
    %194 = math.tanh %193 : vector<8x32xf32>
    %195 = arith.mulf %191, %173 : vector<8x32xf32>
    %196 = arith.mulf %190, %194 : vector<8x32xf32>
    %197 = arith.addf %195, %196 : vector<8x32xf32>
    %198 = math.tanh %197 : vector<8x32xf32>
    %199 = arith.mulf %192, %198 : vector<8x32xf32>
    %200 = arith.index_cast %179 : i32 to index
    %c0_49 = arith.constant 0 : index
    %201 = vector.load %arg12[%200, %c0_49] : memref<64x32xf32, #tpu.memory_space<vmem>>, vector<8x32xf32>
    tpu.vector_store %arg12[%200, %c0_49], %199 {strides = array<i32>} : memref<64x32xf32, #tpu.memory_space<vmem>>, vector<8x32xf32>,
    %c8_i32_50 = arith.constant 8 : i32
    %c0_51 = arith.constant 0 : index
    %c0_52 = arith.constant 0 : index
    %202 = vector.load %arg12[%c0_51, %c0_52] : memref<64x32xf32, #tpu.memory_space<vmem>>, vector<64x32xf32>
    %203 = arith.truncf %202 : vector<64x32xf32> to vector<64x32xbf16>
    %c0_53 = arith.constant 0 : index
    %c0_54 = arith.constant 0 : index
    %204 = vector.load %arg5[%c0_53, %c0_54] : memref<32x128xbf16, #tpu.memory_space<vmem>>, vector<32x128xbf16>
    %cst_55 = arith.constant dense<0.000000e+00> : vector<64x128xf32>
    %205 = tpu.matmul %203, %204, %cst_55 {dimension_numbers = #tpu.dot_dimension_numbers<[1], [0], [0], [1], [0, 0, 1, 1], [], []>} : vector<64x32xbf16>, vector<32x128xbf16>, vector<64x128xf32> -> vector<64x128xf32>
    %c0_56 = arith.constant 0 : index
    %c0_57 = arith.constant 0 : index
    %206 = vector.load %arg7[%c0_56, %c0_57] : memref<1x128xf32, #tpu.memory_space<vmem>>, vector<1x128xf32>
    %207 = vector.broadcast %206 : vector<1x128xf32> to vector<64x128xf32>
    %208 = arith.addf %205, %207 : vector<64x128xf32>
    %c0_58 = arith.constant 0 : index
    %c0_59 = arith.constant 0 : index
    %209 = vector.load %arg11[%c0_58, %c0_59] : memref<64x128xf32, #tpu.memory_space<vmem>>, vector<64x128xf32>
    tpu.vector_store %arg11[%c0_58, %c0_59], %208 {strides = array<i32>} : memref<64x128xf32, #tpu.memory_space<vmem>>, vector<64x128xf32>,
    %c0_60 = arith.constant 0 : index
    %c0_61 = arith.constant 0 : index
    %210 = vector.load %arg6[%c0_60, %c0_61] : memref<32x128xbf16, #tpu.memory_space<vmem>>, vector<32x128xbf16>
    %cst_62 = arith.constant 0.000000e+00 : f32
    %211 = vector.broadcast %cst_62 : f32 to vector<8x32xf32>
    %c0_i32_63 = arith.constant 0 : i32
    %c8_i32_64 = arith.constant 8 : i32
    %212 = arith.muli %c0_i32_63, %c8_i32_64 : i32
    %213 = tpu.assume_multiple %212, 8 : i32
    %214 = arith.index_cast %213 : i32 to index
    %c0_65 = arith.constant 0 : index
    %215 = vector.load %arg11[%214, %c0_65] : memref<64x128xf32, #tpu.memory_space<vmem>>, vector<8x128xf32>
    %216 = arith.truncf %211 : vector<8x32xf32> to vector<8x32xbf16>
    %cst_66 = arith.constant dense<0.000000e+00> : vector<8x128xf32>
    %217 = tpu.matmul %216, %210, %cst_66 {dimension_numbers = #tpu.dot_dimension_numbers<[1], [0], [0], [1], [0, 0, 1, 1], [], []>} : vector<8x32xbf16>, vector<32x128xbf16>, vector<8x128xf32> -> vector<8x128xf32>
    %218 = arith.addf %215, %217 : vector<8x128xf32>
    %219 = arith.negf %218 : vector<8x128xf32>
    %220 = math.exp %219 : vector<8x128xf32>
    %cst_67 = arith.constant 1.000000e+00 : f32
    %221 = vector.broadcast %cst_67 : f32 to vector<8x128xf32>
    %222 = arith.addf %221, %220 : vector<8x128xf32>
    %223 = arith.divf %221, %222 : vector<8x128xf32>
    %224 = vector.extract_strided_slice %223 {offsets = [0, 0], sizes = [8, 32], strides = [1, 1]} : vector<8x128xf32> to vector<8x32xf32>
    %225 = vector.extract_strided_slice %223 {offsets = [0, 32], sizes = [8, 32], strides = [1, 1]} : vector<8x128xf32> to vector<8x32xf32>
    %226 = vector.extract_strided_slice %223 {offsets = [0, 96], sizes = [8, 32], strides = [1, 1]} : vector<8x128xf32> to vector<8x32xf32>
    %227 = vector.extract_strided_slice %218 {offsets = [0, 64], sizes = [8, 32], strides = [1, 1]} : vector<8x128xf32> to vector<8x32xf32>
    %228 = math.tanh %227 : vector<8x32xf32>
    %229 = arith.mulf %225, %211 : vector<8x32xf32>
    %230 = arith.mulf %224, %228 : vector<8x32xf32>
    %231 = arith.addf %229, %230 : vector<8x32xf32>
    %232 = math.tanh %231 : vector<8x32xf32>
    %233 = arith.mulf %226, %232 : vector<8x32xf32>
    %c1_i32_68 = arith.constant 1 : i32
    %c8_i32_69 = arith.constant 8 : i32
    %234 = arith.muli %c1_i32_68, %c8_i32_69 : i32
    %235 = tpu.assume_multiple %234, 8 : i32
    %236 = arith.index_cast %235 : i32 to index
    %c0_70 = arith.constant 0 : index
    %237 = vector.load %arg11[%236, %c0_70] : memref<64x128xf32, #tpu.memory_space<vmem>>, vector<8x128xf32>
    %238 = arith.truncf %233 : vector<8x32xf32> to vector<8x32xbf16>
    %cst_71 = arith.constant dense<0.000000e+00> : vector<8x128xf32>
    %239 = tpu.matmul %238, %210, %cst_71 {dimension_numbers = #tpu.dot_dimension_numbers<[1], [0], [0], [1], [0, 0, 1, 1], [], []>} : vector<8x32xbf16>, vector<32x128xbf16>, vector<8x128xf32> -> vector<8x128xf32>
    %240 = arith.addf %237, %239 : vector<8x128xf32>
    %241 = arith.negf %240 : vector<8x128xf32>
    %242 = math.exp %241 : vector<8x128xf32>
    %cst_72 = arith.constant 1.000000e+00 : f32
    %243 = vector.broadcast %cst_72 : f32 to vector<8x128xf32>
    %244 = arith.addf %243, %242 : vector<8x128xf32>
    %245 = arith.divf %243, %244 : vector<8x128xf32>
    %246 = vector.extract_strided_slice %245 {offsets = [0, 0], sizes = [8, 32], strides = [1, 1]} : vector<8x128xf32> to vector<8x32xf32>
    %247 = vector.extract_strided_slice %245 {offsets = [0, 32], sizes = [8, 32], strides = [1, 1]} : vector<8x128xf32> to vector<8x32xf32>
    %248 = vector.extract_strided_slice %245 {offsets = [0, 96], sizes = [8, 32], strides = [1, 1]} : vector<8x128xf32> to vector<8x32xf32>
    %249 = vector.extract_strided_slice %240 {offsets = [0, 64], sizes = [8, 32], strides = [1, 1]} : vector<8x128xf32> to vector<8x32xf32>
    %250 = math.tanh %249 : vector<8x32xf32>
    %251 = arith.mulf %247, %231 : vector<8x32xf32>
    %252 = arith.mulf %246, %250 : vector<8x32xf32>
    %253 = arith.addf %251, %252 : vector<8x32xf32>
    %254 = math.tanh %253 : vector<8x32xf32>
    %255 = arith.mulf %248, %254 : vector<8x32xf32>
    %c2_i32_73 = arith.constant 2 : i32
    %c8_i32_74 = arith.constant 8 : i32
    %256 = arith.muli %c2_i32_73, %c8_i32_74 : i32
    %257 = tpu.assume_multiple %256, 8 : i32
    %258 = arith.index_cast %257 : i32 to index
    %c0_75 = arith.constant 0 : index
    %259 = vector.load %arg11[%258, %c0_75] : memref<64x128xf32, #tpu.memory_space<vmem>>, vector<8x128xf32>
    %260 = arith.truncf %255 : vector<8x32xf32> to vector<8x32xbf16>
    %cst_76 = arith.constant dense<0.000000e+00> : vector<8x128xf32>
    %261 = tpu.matmul %260, %210, %cst_76 {dimension_numbers = #tpu.dot_dimension_numbers<[1], [0], [0], [1], [0, 0, 1, 1], [], []>} : vector<8x32xbf16>, vector<32x128xbf16>, vector<8x128xf32> -> vector<8x128xf32>
    %262 = arith.addf %259, %261 : vector<8x128xf32>
    %263 = arith.negf %262 : vector<8x128xf32>
    %264 = math.exp %263 : vector<8x128xf32>
    %cst_77 = arith.constant 1.000000e+00 : f32
    %265 = vector.broadcast %cst_77 : f32 to vector<8x128xf32>
    %266 = arith.addf %265, %264 : vector<8x128xf32>
    %267 = arith.divf %265, %266 : vector<8x128xf32>
    %268 = vector.extract_strided_slice %267 {offsets = [0, 0], sizes = [8, 32], strides = [1, 1]} : vector<8x128xf32> to vector<8x32xf32>
    %269 = vector.extract_strided_slice %267 {offsets = [0, 32], sizes = [8, 32], strides = [1, 1]} : vector<8x128xf32> to vector<8x32xf32>
    %270 = vector.extract_strided_slice %267 {offsets = [0, 96], sizes = [8, 32], strides = [1, 1]} : vector<8x128xf32> to vector<8x32xf32>
    %271 = vector.extract_strided_slice %262 {offsets = [0, 64], sizes = [8, 32], strides = [1, 1]} : vector<8x128xf32> to vector<8x32xf32>
    %272 = math.tanh %271 : vector<8x32xf32>
    %273 = arith.mulf %269, %253 : vector<8x32xf32>
    %274 = arith.mulf %268, %272 : vector<8x32xf32>
    %275 = arith.addf %273, %274 : vector<8x32xf32>
    %276 = math.tanh %275 : vector<8x32xf32>
    %277 = arith.mulf %270, %276 : vector<8x32xf32>
    %c3_i32_78 = arith.constant 3 : i32
    %c8_i32_79 = arith.constant 8 : i32
    %278 = arith.muli %c3_i32_78, %c8_i32_79 : i32
    %279 = tpu.assume_multiple %278, 8 : i32
    %280 = arith.index_cast %279 : i32 to index
    %c0_80 = arith.constant 0 : index
    %281 = vector.load %arg11[%280, %c0_80] : memref<64x128xf32, #tpu.memory_space<vmem>>, vector<8x128xf32>
    %282 = arith.truncf %277 : vector<8x32xf32> to vector<8x32xbf16>
    %cst_81 = arith.constant dense<0.000000e+00> : vector<8x128xf32>
    %283 = tpu.matmul %282, %210, %cst_81 {dimension_numbers = #tpu.dot_dimension_numbers<[1], [0], [0], [1], [0, 0, 1, 1], [], []>} : vector<8x32xbf16>, vector<32x128xbf16>, vector<8x128xf32> -> vector<8x128xf32>
    %284 = arith.addf %281, %283 : vector<8x128xf32>
    %285 = arith.negf %284 : vector<8x128xf32>
    %286 = math.exp %285 : vector<8x128xf32>
    %cst_82 = arith.constant 1.000000e+00 : f32
    %287 = vector.broadcast %cst_82 : f32 to vector<8x128xf32>
    %288 = arith.addf %287, %286 : vector<8x128xf32>
    %289 = arith.divf %287, %288 : vector<8x128xf32>
    %290 = vector.extract_strided_slice %289 {offsets = [0, 0], sizes = [8, 32], strides = [1, 1]} : vector<8x128xf32> to vector<8x32xf32>
    %291 = vector.extract_strided_slice %289 {offsets = [0, 32], sizes = [8, 32], strides = [1, 1]} : vector<8x128xf32> to vector<8x32xf32>
    %292 = vector.extract_strided_slice %289 {offsets = [0, 96], sizes = [8, 32], strides = [1, 1]} : vector<8x128xf32> to vector<8x32xf32>
    %293 = vector.extract_strided_slice %284 {offsets = [0, 64], sizes = [8, 32], strides = [1, 1]} : vector<8x128xf32> to vector<8x32xf32>
    %294 = math.tanh %293 : vector<8x32xf32>
    %295 = arith.mulf %291, %275 : vector<8x32xf32>
    %296 = arith.mulf %290, %294 : vector<8x32xf32>
    %297 = arith.addf %295, %296 : vector<8x32xf32>
    %298 = math.tanh %297 : vector<8x32xf32>
    %299 = arith.mulf %292, %298 : vector<8x32xf32>
    %c4_i32_83 = arith.constant 4 : i32
    %c8_i32_84 = arith.constant 8 : i32
    %300 = arith.muli %c4_i32_83, %c8_i32_84 : i32
    %301 = tpu.assume_multiple %300, 8 : i32
    %302 = arith.index_cast %301 : i32 to index
    %c0_85 = arith.constant 0 : index
    %303 = vector.load %arg11[%302, %c0_85] : memref<64x128xf32, #tpu.memory_space<vmem>>, vector<8x128xf32>
    %304 = arith.truncf %299 : vector<8x32xf32> to vector<8x32xbf16>
    %cst_86 = arith.constant dense<0.000000e+00> : vector<8x128xf32>
    %305 = tpu.matmul %304, %210, %cst_86 {dimension_numbers = #tpu.dot_dimension_numbers<[1], [0], [0], [1], [0, 0, 1, 1], [], []>} : vector<8x32xbf16>, vector<32x128xbf16>, vector<8x128xf32> -> vector<8x128xf32>
    %306 = arith.addf %303, %305 : vector<8x128xf32>
    %307 = arith.negf %306 : vector<8x128xf32>
    %308 = math.exp %307 : vector<8x128xf32>
    %cst_87 = arith.constant 1.000000e+00 : f32
    %309 = vector.broadcast %cst_87 : f32 to vector<8x128xf32>
    %310 = arith.addf %309, %308 : vector<8x128xf32>
    %311 = arith.divf %309, %310 : vector<8x128xf32>
    %312 = vector.extract_strided_slice %311 {offsets = [0, 0], sizes = [8, 32], strides = [1, 1]} : vector<8x128xf32> to vector<8x32xf32>
    %313 = vector.extract_strided_slice %311 {offsets = [0, 32], sizes = [8, 32], strides = [1, 1]} : vector<8x128xf32> to vector<8x32xf32>
    %314 = vector.extract_strided_slice %311 {offsets = [0, 96], sizes = [8, 32], strides = [1, 1]} : vector<8x128xf32> to vector<8x32xf32>
    %315 = vector.extract_strided_slice %306 {offsets = [0, 64], sizes = [8, 32], strides = [1, 1]} : vector<8x128xf32> to vector<8x32xf32>
    %316 = math.tanh %315 : vector<8x32xf32>
    %317 = arith.mulf %313, %297 : vector<8x32xf32>
    %318 = arith.mulf %312, %316 : vector<8x32xf32>
    %319 = arith.addf %317, %318 : vector<8x32xf32>
    %320 = math.tanh %319 : vector<8x32xf32>
    %321 = arith.mulf %314, %320 : vector<8x32xf32>
    %c5_i32_88 = arith.constant 5 : i32
    %c8_i32_89 = arith.constant 8 : i32
    %322 = arith.muli %c5_i32_88, %c8_i32_89 : i32
    %323 = tpu.assume_multiple %322, 8 : i32
    %324 = arith.index_cast %323 : i32 to index
    %c0_90 = arith.constant 0 : index
    %325 = vector.load %arg11[%324, %c0_90] : memref<64x128xf32, #tpu.memory_space<vmem>>, vector<8x128xf32>
    %326 = arith.truncf %321 : vector<8x32xf32> to vector<8x32xbf16>
    %cst_91 = arith.constant dense<0.000000e+00> : vector<8x128xf32>
    %327 = tpu.matmul %326, %210, %cst_91 {dimension_numbers = #tpu.dot_dimension_numbers<[1], [0], [0], [1], [0, 0, 1, 1], [], []>} : vector<8x32xbf16>, vector<32x128xbf16>, vector<8x128xf32> -> vector<8x128xf32>
    %328 = arith.addf %325, %327 : vector<8x128xf32>
    %329 = arith.negf %328 : vector<8x128xf32>
    %330 = math.exp %329 : vector<8x128xf32>
    %cst_92 = arith.constant 1.000000e+00 : f32
    %331 = vector.broadcast %cst_92 : f32 to vector<8x128xf32>
    %332 = arith.addf %331, %330 : vector<8x128xf32>
    %333 = arith.divf %331, %332 : vector<8x128xf32>
    %334 = vector.extract_strided_slice %333 {offsets = [0, 0], sizes = [8, 32], strides = [1, 1]} : vector<8x128xf32> to vector<8x32xf32>
    %335 = vector.extract_strided_slice %333 {offsets = [0, 32], sizes = [8, 32], strides = [1, 1]} : vector<8x128xf32> to vector<8x32xf32>
    %336 = vector.extract_strided_slice %333 {offsets = [0, 96], sizes = [8, 32], strides = [1, 1]} : vector<8x128xf32> to vector<8x32xf32>
    %337 = vector.extract_strided_slice %328 {offsets = [0, 64], sizes = [8, 32], strides = [1, 1]} : vector<8x128xf32> to vector<8x32xf32>
    %338 = math.tanh %337 : vector<8x32xf32>
    %339 = arith.mulf %335, %319 : vector<8x32xf32>
    %340 = arith.mulf %334, %338 : vector<8x32xf32>
    %341 = arith.addf %339, %340 : vector<8x32xf32>
    %342 = math.tanh %341 : vector<8x32xf32>
    %343 = arith.mulf %336, %342 : vector<8x32xf32>
    %c6_i32_93 = arith.constant 6 : i32
    %c8_i32_94 = arith.constant 8 : i32
    %344 = arith.muli %c6_i32_93, %c8_i32_94 : i32
    %345 = tpu.assume_multiple %344, 8 : i32
    %346 = arith.index_cast %345 : i32 to index
    %c0_95 = arith.constant 0 : index
    %347 = vector.load %arg11[%346, %c0_95] : memref<64x128xf32, #tpu.memory_space<vmem>>, vector<8x128xf32>
    %348 = arith.truncf %343 : vector<8x32xf32> to vector<8x32xbf16>
    %cst_96 = arith.constant dense<0.000000e+00> : vector<8x128xf32>
    %349 = tpu.matmul %348, %210, %cst_96 {dimension_numbers = #tpu.dot_dimension_numbers<[1], [0], [0], [1], [0, 0, 1, 1], [], []>} : vector<8x32xbf16>, vector<32x128xbf16>, vector<8x128xf32> -> vector<8x128xf32>
    %350 = arith.addf %347, %349 : vector<8x128xf32>
    %351 = arith.negf %350 : vector<8x128xf32>
    %352 = math.exp %351 : vector<8x128xf32>
    %cst_97 = arith.constant 1.000000e+00 : f32
    %353 = vector.broadcast %cst_97 : f32 to vector<8x128xf32>
    %354 = arith.addf %353, %352 : vector<8x128xf32>
    %355 = arith.divf %353, %354 : vector<8x128xf32>
    %356 = vector.extract_strided_slice %355 {offsets = [0, 0], sizes = [8, 32], strides = [1, 1]} : vector<8x128xf32> to vector<8x32xf32>
    %357 = vector.extract_strided_slice %355 {offsets = [0, 32], sizes = [8, 32], strides = [1, 1]} : vector<8x128xf32> to vector<8x32xf32>
    %358 = vector.extract_strided_slice %355 {offsets = [0, 96], sizes = [8, 32], strides = [1, 1]} : vector<8x128xf32> to vector<8x32xf32>
    %359 = vector.extract_strided_slice %350 {offsets = [0, 64], sizes = [8, 32], strides = [1, 1]} : vector<8x128xf32> to vector<8x32xf32>
    %360 = math.tanh %359 : vector<8x32xf32>
    %361 = arith.mulf %357, %341 : vector<8x32xf32>
    %362 = arith.mulf %356, %360 : vector<8x32xf32>
    %363 = arith.addf %361, %362 : vector<8x32xf32>
    %364 = math.tanh %363 : vector<8x32xf32>
    %365 = arith.mulf %358, %364 : vector<8x32xf32>
    %c7_i32_98 = arith.constant 7 : i32
    %c8_i32_99 = arith.constant 8 : i32
    %366 = arith.muli %c7_i32_98, %c8_i32_99 : i32
    %367 = tpu.assume_multiple %366, 8 : i32
    %368 = arith.index_cast %367 : i32 to index
    %c0_100 = arith.constant 0 : index
    %369 = vector.load %arg11[%368, %c0_100] : memref<64x128xf32, #tpu.memory_space<vmem>>, vector<8x128xf32>
    %370 = arith.truncf %365 : vector<8x32xf32> to vector<8x32xbf16>
    %cst_101 = arith.constant dense<0.000000e+00> : vector<8x128xf32>
    %371 = tpu.matmul %370, %210, %cst_101 {dimension_numbers = #tpu.dot_dimension_numbers<[1], [0], [0], [1], [0, 0, 1, 1], [], []>} : vector<8x32xbf16>, vector<32x128xbf16>, vector<8x128xf32> -> vector<8x128xf32>
    %372 = arith.addf %369, %371 : vector<8x128xf32>
    %373 = arith.negf %372 : vector<8x128xf32>
    %374 = math.exp %373 : vector<8x128xf32>
    %cst_102 = arith.constant 1.000000e+00 : f32
    %375 = vector.broadcast %cst_102 : f32 to vector<8x128xf32>
    %376 = arith.addf %375, %374 : vector<8x128xf32>
    %377 = arith.divf %375, %376 : vector<8x128xf32>
    %378 = vector.extract_strided_slice %377 {offsets = [0, 0], sizes = [8, 32], strides = [1, 1]} : vector<8x128xf32> to vector<8x32xf32>
    %379 = vector.extract_strided_slice %377 {offsets = [0, 32], sizes = [8, 32], strides = [1, 1]} : vector<8x128xf32> to vector<8x32xf32>
    %380 = vector.extract_strided_slice %377 {offsets = [0, 96], sizes = [8, 32], strides = [1, 1]} : vector<8x128xf32> to vector<8x32xf32>
    %381 = vector.extract_strided_slice %372 {offsets = [0, 64], sizes = [8, 32], strides = [1, 1]} : vector<8x128xf32> to vector<8x32xf32>
    %382 = math.tanh %381 : vector<8x32xf32>
    %383 = arith.mulf %379, %363 : vector<8x32xf32>
    %384 = arith.mulf %378, %382 : vector<8x32xf32>
    %385 = arith.addf %383, %384 : vector<8x32xf32>
    %386 = math.tanh %385 : vector<8x32xf32>
    %387 = arith.mulf %380, %386 : vector<8x32xf32>
    %c8_i32_103 = arith.constant 8 : i32
    %388 = arith.truncf %387 : vector<8x32xf32> to vector<8x32xbf16>
    %c0_104 = arith.constant 0 : index
    %c0_105 = arith.constant 0 : index
    %389 = vector.load %arg8[%c0_104, %c0_105] : memref<32x128xbf16, #tpu.memory_space<vmem>>, vector<32x128xbf16>
    %cst_106 = arith.constant dense<0.000000e+00> : vector<8x128xf32>
    %390 = tpu.matmul %388, %389, %cst_106 {dimension_numbers = #tpu.dot_dimension_numbers<[1], [0], [0], [1], [0, 0, 1, 1], [], []>} : vector<8x32xbf16>, vector<32x128xbf16>, vector<8x128xf32> -> vector<8x128xf32>
    %c0_107 = arith.constant 0 : index
    %c0_108 = arith.constant 0 : index
    %391 = vector.load %arg9[%c0_107, %c0_108] : memref<1x128xf32, #tpu.memory_space<vmem>>, vector<1x128xf32>
    %392 = vector.broadcast %391 : vector<1x128xf32> to vector<8x128xf32>
    %393 = arith.addf %390, %392 : vector<8x128xf32>
    %c0_109 = arith.constant 0 : index
    %c0_110 = arith.constant 0 : index
    %394 = vector.load %arg10[%c0_109, %c0_110] : memref<8x128xf32, #tpu.memory_space<vmem>>, vector<8x128xf32>
    tpu.vector_store %arg10[%c0_109, %c0_110], %393 {strides = array<i32>} : memref<8x128xf32, #tpu.memory_space<vmem>>, vector<8x128xf32>,
    return
  }
  func.func @transform_0(%arg0: i32) -> (i32, i32, i32) {
    %c0_i32 = arith.constant 0 : i32
    %c0_i32_0 = arith.constant 0 : i32
    %c0_i32_1 = arith.constant 0 : i32
    return %arg0, %c0_i32, %c0_i32_0 : i32, i32, i32
  }
  func.func @transform_1(%arg0: i32) -> (i32, i32) {
    %c0_i32 = arith.constant 0 : i32
    %c0_i32_0 = arith.constant 0 : i32
    %c0_i32_1 = arith.constant 0 : i32
    return %c0_i32, %c0_i32_0 : i32, i32
  }
  func.func @transform_2(%arg0: i32) -> (i32, i32) {
    %c0_i32 = arith.constant 0 : i32
    %c0_i32_0 = arith.constant 0 : i32
    %c0_i32_1 = arith.constant 0 : i32
    return %c0_i32, %c0_i32_0 : i32, i32
  }
  func.func @transform_3(%arg0: i32) -> (i32, i32) {
    %c0_i32 = arith.constant 0 : i32
    %c0_i32_0 = arith.constant 0 : i32
    %c0_i32_1 = arith.constant 0 : i32
    return %c0_i32, %c0_i32_0 : i32, i32
  }
  func.func @transform_4(%arg0: i32) -> (i32, i32) {
    %c0_i32 = arith.constant 0 : i32
    %c0_i32_0 = arith.constant 0 : i32
    %c0_i32_1 = arith.constant 0 : i32
    return %c0_i32, %c0_i32_0 : i32, i32
  }
  func.func @transform_5(%arg0: i32) -> (i32, i32) {
    %c0_i32 = arith.constant 0 : i32
    %c0_i32_0 = arith.constant 0 : i32
    %c0_i32_1 = arith.constant 0 : i32
    return %c0_i32, %c0_i32_0 : i32, i32
  }
  func.func @transform_6(%arg0: i32) -> (i32, i32) {
    %c0_i32 = arith.constant 0 : i32
    %c0_i32_0 = arith.constant 0 : i32
    %c0_i32_1 = arith.constant 0 : i32
    return %c0_i32, %c0_i32_0 : i32, i32
  }
  func.func @transform_7(%arg0: i32) -> (i32, i32) {
    %c0_i32 = arith.constant 0 : i32
    %c0_i32_0 = arith.constant 0 : i32
    %c0_i32_1 = arith.constant 0 : i32
    return %c0_i32, %c0_i32_0 : i32, i32
  }
  func.func @transform_8(%arg0: i32) -> (i32, i32) {
    %c0_i32 = arith.constant 0 : i32
    %c0_i32_0 = arith.constant 0 : i32
    %c0_i32_1 = arith.constant 0 : i32
    return %c0_i32, %c0_i32_0 : i32, i32
  }
  func.func @transform_9(%arg0: i32) -> (i32, i32) {
    %c0_i32 = arith.constant 0 : i32
    %c0_i32_0 = arith.constant 0 : i32
    return %arg0, %c0_i32 : i32, i32
  }
}

</mosaic_0001>

<llo_original>
// kernel: lstm_model_forward.1
$region0: #{lstm_model_forward.1}
  #allocation0 [shape = 'u32[]', space=smem, size = 0x4, offset = 0x4, fixed_abs, tag = 'smem constant byte address 0x4 - core index']
  #allocation1 [shape = 'u32[144,128]{1,0:T(1,128)}', space=vmem, size = 0x12000, scoped, tag = 'internal scratch']
  #allocation2 [shape = 'f32[64,128]{1,0:T(8,128)}', space=vmem, size = 0x8000, scoped, tag = 'scratch operand']
  #allocation3 [shape = 'f32[64,32]{1,0:T(8,128)}', space=vmem, size = 0x8000, scoped, tag = 'scratch operand']
  %s0 = inlined_call_operand.vmem [shape: bf16[1,64,128], index: 0, kind: input, shape index: {}]
  %s1 = inlined_call_operand.vmem [shape: bf16[128,128], index: 1, kind: input, shape index: {}]
  %s2 = inlined_call_operand.vmem [shape: bf16[32,128], index: 2, kind: input, shape index: {}]
  %s3 = inlined_call_operand.vmem [shape: f32[1,128], index: 3, kind: input, shape index: {}]
  %s4 = inlined_call_operand.vmem [shape: bf16[32,128], index: 4, kind: input, shape index: {}]
  %s5 = inlined_call_operand.vmem [shape: bf16[32,128], index: 5, kind: input, shape index: {}]
  %s6 = inlined_call_operand.vmem [shape: f32[1,128], index: 6, kind: input, shape index: {}]
  %s7 = inlined_call_operand.vmem [shape: bf16[32,128], index: 7, kind: input, shape index: {}]
  %s8 = inlined_call_operand.vmem [shape: f32[1,128], index: 8, kind: input, shape index: {}]
  %s9 = inlined_call_operand.vmem [shape: f32[8,128], index: 9, kind: output, shape index: {}]
  %s10 = sld [smem:[#allocation0]]
  $region46: #{lstm_model_forward.1} parent=0
    _
  %s12 = ssub.s32 1, %s10
  %s13 = scalar_select 0, %s12, %s10
  // Predicated region
  $region2: #{lstm_model_forward.1} parent=0 // pred_check
    _
  $region3: #{lstm_model_forward.1} parent=0 // pred_check_branch
    %15 = sbr.rel (0) target = $region5
  $region4: #{lstm_model_forward.1} parent=0 // pred_region
    _
  $region5: #{lstm_model_forward.1} parent=0 // pred_fallthru
    _
  // Predicated region
  $region6: #{lstm_model_forward.1} parent=0 // pred_check
    _
  $region7: #{lstm_model_forward.1} parent=0 // pred_check_branch
    %17 = sbr.rel (0) target = $region9
  $region8: #{lstm_model_forward.1} parent=0 // pred_region
    _
  $region9: #{lstm_model_forward.1} parent=0 // pred_fallthru
    _
  // Predicated region
  $region10: #{lstm_model_forward.1} parent=0 // pred_check
    _
  $region11: #{lstm_model_forward.1} parent=0 // pred_check_branch
    %19 = sbr.rel (0) target = $region13
  $region12: #{lstm_model_forward.1} parent=0 // pred_region
    _
  $region13: #{lstm_model_forward.1} parent=0 // pred_fallthru
    _
  // Predicated region
  $region14: #{lstm_model_forward.1} parent=0 // pred_check
    _
  $region15: #{lstm_model_forward.1} parent=0 // pred_check_branch
    %21 = sbr.rel (0) target = $region17
  $region16: #{lstm_model_forward.1} parent=0 // pred_region
    _
  $region17: #{lstm_model_forward.1} parent=0 // pred_fallthru
    _
  // Predicated region
  $region18: #{lstm_model_forward.1} parent=0 // pred_check
    _
  $region19: #{lstm_model_forward.1} parent=0 // pred_check_branch
    %23 = sbr.rel (0) target = $region21
  $region20: #{lstm_model_forward.1} parent=0 // pred_region
    _
  $region21: #{lstm_model_forward.1} parent=0 // pred_fallthru
    _
  // Predicated region
  $region22: #{lstm_model_forward.1} parent=0 // pred_check
    _
  $region23: #{lstm_model_forward.1} parent=0 // pred_check_branch
    %25 = sbr.rel (0) target = $region25
  $region24: #{lstm_model_forward.1} parent=0 // pred_region
    _
  $region25: #{lstm_model_forward.1} parent=0 // pred_fallthru
    _
  // Predicated region
  $region26: #{lstm_model_forward.1} parent=0 // pred_check
    _
  $region27: #{lstm_model_forward.1} parent=0 // pred_check_branch
    %27 = sbr.rel (0) target = $region29
  $region28: #{lstm_model_forward.1} parent=0 // pred_region
    _
  $region29: #{lstm_model_forward.1} parent=0 // pred_fallthru
    _
  // Predicated region
  $region30: #{lstm_model_forward.1} parent=0 // pred_check
    _
  $region31: #{lstm_model_forward.1} parent=0 // pred_check_branch
    %29 = sbr.rel (0) target = $region33
  $region32: #{lstm_model_forward.1} parent=0 // pred_region
    _
  $region33: #{lstm_model_forward.1} parent=0 // pred_fallthru
    _
  // Predicated region
  $region34: #{lstm_model_forward.1} parent=0 // pred_check
    _
  $region35: #{lstm_model_forward.1} parent=0 // pred_check_branch
    %31 = sbr.rel (0) target = $region37
  $region36: #{lstm_model_forward.1} parent=0 // pred_region
    _
  $region37: #{lstm_model_forward.1} parent=0 // pred_fallthru
    _
  %v33 = vld [vmem:[%s0] sm:$0xf]
  %v34 = vld [vmem:[%s0 + $0x4] sm:$0xf]
  %v35 = vld [vmem:[%s0 + $0x8] sm:$0xf]
  %v36 = vld [vmem:[%s0 + $0xc] sm:$0xf]
  %v37 = vld [vmem:[%s0 + $0x10] sm:$0xf]
  %v38 = vld [vmem:[%s0 + $0x14] sm:$0xf]
  %v39 = vld [vmem:[%s0 + $0x18] sm:$0xf]
  %v40 = vld [vmem:[%s0 + $0x1c] sm:$0xf]
  %v41 = vld [vmem:[%s1] sm:$0xf]
  %v42 = vld [vmem:[%s1 + $0x4] sm:$0xf]
  %v43 = vld [vmem:[%s1 + $0x8] sm:$0xf]
  %v44 = vld [vmem:[%s1 + $0xc] sm:$0xf]
  %v45 = vld [vmem:[%s1 + $0x10] sm:$0xf]
  %v46 = vld [vmem:[%s1 + $0x14] sm:$0xf]
  %v47 = vld [vmem:[%s1 + $0x18] sm:$0xf]
  %v48 = vld [vmem:[%s1 + $0x1c] sm:$0xf]
  %v49 = vld [vmem:[%s1 + $0x20] sm:$0xf]
  %v50 = vld [vmem:[%s1 + $0x24] sm:$0xf]
  %v51 = vld [vmem:[%s1 + $0x28] sm:$0xf]
  %v52 = vld [vmem:[%s1 + $0x2c] sm:$0xf]
  %v53 = vld [vmem:[%s1 + $0x30] sm:$0xf]
  %v54 = vld [vmem:[%s1 + $0x34] sm:$0xf]
  %v55 = vld [vmem:[%s1 + $0x38] sm:$0xf]
  %v56 = vld [vmem:[%s1 + $0x3c] sm:$0xf]
  %v57 = vld [vmem:[%s3] sm:$0x1]
  %v59 = vlaneseq
  %v60 = vshrl.u32 %v59, 7
  %v61 = vsub.s32 0, %v60
  %v62 = vrot.slane %v57, %v61
  %v72 = vunpack.c.l.b16 %v33
  %v73 = vunpack.c.l.b16 %v34
  %v74 = vunpack.c.l.b16 %v35
  %v75 = vunpack.c.l.b16 %v36
  %v76 = vunpack.c.l.b16 %v37
  %v77 = vunpack.c.l.b16 %v38
  %v78 = vunpack.c.l.b16 %v39
  %v79 = vunpack.c.l.b16 %v40
  %v80 = vpack.c.b16 %v73, %v72
  %v81 = vpack.c.b16 %v75, %v74
  %v82 = vpack.c.b16 %v77, %v76
  %v83 = vpack.c.b16 %v79, %v78
  %v104 = vunpack.c.l.b16 %v41
  %v105 = vunpack.c.l.b16 %v42
  %v106 = vunpack.c.l.b16 %v43
  %v107 = vunpack.c.l.b16 %v44
  %v108 = vunpack.c.l.b16 %v45
  %v109 = vunpack.c.l.b16 %v46
  %v110 = vunpack.c.l.b16 %v47
  %v111 = vunpack.c.l.b16 %v48
  %v112 = vunpack.c.l.b16 %v49
  %v113 = vunpack.c.l.b16 %v50
  %v114 = vunpack.c.l.b16 %v51
  %v115 = vunpack.c.l.b16 %v52
  %v116 = vunpack.c.l.b16 %v53
  %v117 = vunpack.c.l.b16 %v54
  %v118 = vunpack.c.l.b16 %v55
  %v119 = vunpack.c.l.b16 %v56
  %v120 = vpack.c.b16 %v105, %v104
  %v121 = vpack.c.b16 %v107, %v106
  %v122 = vpack.c.b16 %v109, %v108
  %v123 = vpack.c.b16 %v111, %v110
  %v124 = vpack.c.b16 %v113, %v112
  %v125 = vpack.c.b16 %v115, %v114
  %v126 = vpack.c.b16 %v117, %v116
  %v127 = vpack.c.b16 %v119, %v118
  %136 = vmatprep.subr.bf16.mxu0 0
  %137 = vmatpush1.bf16.msra.mxu0 %v120
  %138 = vmatprep.subr.bf16.mxu0 0
  %139 = vmatpush1.bf16.msra.mxu0 %v121
  %140 = vmatprep.subr.bf16.mxu0 0
  %141 = vmatpush1.bf16.msra.mxu0 %v122
  %142 = vmatprep.subr.bf16.mxu0 0
  %143 = vmatpush1.bf16.msra.mxu0 %v123
  %144 = vmatprep.subr.bf16.mxu0 0
  %145 = vmatpush1.bf16.msra.mxu0 %v124
  %146 = vmatprep.subr.bf16.mxu0 0
  %147 = vmatpush1.bf16.msra.mxu0 %v125
  %148 = vmatprep.subr.bf16.mxu0 0
  %149 = vmatpush1.bf16.msra.mxu0 %v126
  %150 = vmatprep.subr.bf16.mxu0 0
  %151 = vmatpush1.bf16.msra.mxu0 %v127
  %152 = vmatprep.subr.bf16.mxu0 0
  %153 = vmatpush1.bf16.msra.mxu0 0
  %154 = vmatprep.subr.bf16.mxu0 0
  %155 = vmatpush1.bf16.msra.mxu0 0
  %156 = vmatprep.subr.bf16.mxu0 0
  %157 = vmatpush1.bf16.msra.mxu0 0
  %158 = vmatprep.subr.bf16.mxu0 0
  %159 = vmatpush1.bf16.msra.mxu0 0
  %160 = vmatprep.subr.bf16.mxu0 0
  %161 = vmatpush1.bf16.msra.mxu0 0
  %162 = vmatprep.subr.bf16.mxu0 0
  %163 = vmatpush1.bf16.msra.mxu0 0
  %164 = vmatprep.subr.bf16.mxu0 0
  %165 = vmatpush1.bf16.msra.mxu0 0
  %166 = vmatprep.subr.bf16.mxu0 0
  %167 = vmatpush1.bf16.msra.mxu0 0
  %168 = vmatprep.mubr.bf16.mxu0 0
  %169 = vmatmul.mubr.bf16.gmra.mrb[0].mxu0 %v80
  %v170 = vpop.f32.mrb[0].mxu0
  %v171 = vadd.f32 %v62, %v170
  %v172 = vpop.f32.mrb[0].mxu0
  %v173 = vpop.f32.mrb[0].mxu0
  %v174 = vadd.f32 %v62, %v173
  %v175 = vpop.f32.mrb[0].mxu0
  %176 = vmatprep.mubr.bf16.mxu0 0
  %177 = vmatmul.mubr.bf16.gmra.mrb[0].mxu0 %v81
  %v178 = vpop.f32.mrb[0].mxu0
  %v179 = vadd.f32 %v62, %v178
  %v180 = vpop.f32.mrb[0].mxu0
  %v181 = vpop.f32.mrb[0].mxu0
  %v182 = vadd.f32 %v62, %v181
  %v183 = vpop.f32.mrb[0].mxu0
  %184 = vmatprep.mubr.bf16.mxu0 0
  %185 = vmatmul.mubr.bf16.gmra.mrb[0].mxu0 %v82
  %v186 = vpop.f32.mrb[0].mxu0
  %v187 = vadd.f32 %v62, %v186
  %v188 = vpop.f32.mrb[0].mxu0
  %v189 = vpop.f32.mrb[0].mxu0
  %v190 = vadd.f32 %v62, %v189
  %v191 = vpop.f32.mrb[0].mxu0
  %192 = vmatprep.mubr.bf16.mxu0 0
  %193 = vmatmul.mubr.bf16.gmra.mrb[0].mxu0 %v83
  %v194 = vpop.f32.mrb[0].mxu0
  %v195 = vadd.f32 %v62, %v194
  %v196 = vpop.f32.mrb[0].mxu0
  %v197 = vpop.f32.mrb[0].mxu0
  %v198 = vadd.f32 %v62, %v197
  %v199 = vpop.f32.mrb[0].mxu0
  %200 = vdwg.mxu0
  %201 = vst [vmem:[#allocation2] sm:$0xff] %v171
  %202 = vst [vmem:[#allocation2 + $0x8] sm:$0xff] %v174
  %203 = vst [vmem:[#allocation2 + $0x10] sm:$0xff] %v179
  %204 = vst [vmem:[#allocation2 + $0x18] sm:$0xff] %v182
  %205 = vst [vmem:[#allocation2 + $0x20] sm:$0xff] %v187
  %206 = vst [vmem:[#allocation2 + $0x28] sm:$0xff] %v190
  %207 = vst [vmem:[#allocation2 + $0x30] sm:$0xff] %v195
  %208 = vst [vmem:[#allocation2 + $0x38] sm:$0xff] %v198
  %v209 = vld [vmem:[%s2] sm:$0xf]
  %v210 = vld [vmem:[%s2 + $0x4] sm:$0xf]
  %v211 = vld [vmem:[%s2 + $0x8] sm:$0xf]
  %v212 = vld [vmem:[%s2 + $0xc] sm:$0xf]
  %v213 = vld [vmem:[#allocation2] sm:$0xff]
  %v218 = vunpack.c.l.b16 %v209
  %v219 = vunpack.c.l.b16 %v210
  %v220 = vunpack.c.l.b16 %v211
  %v221 = vunpack.c.l.b16 %v212
  %v222 = vpack.c.b16 %v219, %v218
  %v223 = vpack.c.b16 %v221, %v220
  %vm226 = vcmask 261120
  %v228 = vsel %vm226, 0, 0
  %230 = vmatprep.subr.bf16.mxu0 0
  %231 = vmatpush1.bf16.msra.mxu0 %v222
  %232 = vmatprep.subr.bf16.mxu0 0
  %233 = vmatpush1.bf16.msra.mxu0 %v223
  %234 = vmatprep.subr.bf16.mxu0 0
  %235 = vmatpush1.bf16.msra.mxu0 0
  %236 = vmatprep.subr.bf16.mxu0 0
  %237 = vmatpush1.bf16.msra.mxu0 0
  %238 = vmatprep.subr.bf16.mxu0 0
  %239 = vmatpush1.bf16.msra.mxu0 0
  %240 = vmatprep.subr.bf16.mxu0 0
  %241 = vmatpush1.bf16.msra.mxu0 0
  %242 = vmatprep.subr.bf16.mxu0 0
  %243 = vmatpush1.bf16.msra.mxu0 0
  %244 = vmatprep.subr.bf16.mxu0 0
  %245 = vmatpush1.bf16.msra.mxu0 0
  %246 = vmatprep.subr.bf16.mxu0 0
  %247 = vmatpush1.bf16.msra.mxu0 0
  %248 = vmatprep.subr.bf16.mxu0 0
  %249 = vmatpush1.bf16.msra.mxu0 0
  %250 = vmatprep.subr.bf16.mxu0 0
  %251 = vmatpush1.bf16.msra.mxu0 0
  %252 = vmatprep.subr.bf16.mxu0 0
  %253 = vmatpush1.bf16.msra.mxu0 0
  %254 = vmatprep.subr.bf16.mxu0 0
  %255 = vmatpush1.bf16.msra.mxu0 0
  %256 = vmatprep.subr.bf16.mxu0 0
  %257 = vmatpush1.bf16.msra.mxu0 0
  %258 = vmatprep.subr.bf16.mxu0 0
  %259 = vmatpush1.bf16.msra.mxu0 0
  %260 = vmatprep.subr.bf16.mxu0 0
  %261 = vmatpush1.bf16.msra.mxu0 0
  %262 = vmatprep.mubr.bf16.mxu0 0
  %263 = vmatmul.mubr.bf16.gmra.mrb[0].mxu0 %v228
  %v264 = vpop.f32.mrb[0].mxu0
  %v265 = vadd.f32 0.0, %v264
  %v266 = vpop.f32.mrb[0].mxu0
  %v267 = vpop.f32.mrb[0].mxu0
  %v268 = vpop.f32.mrb[0].mxu0
  %269 = vdwg.mxu0
  %v270 = vadd.f32 %v213, %v265
  %v271 = vxor.u32 %v270, 2147483648
  %v272 = vmul.f32 %v271, 1.442695
  %v273 = vpow.pop %v272
  %v274 = vadd.f32 %v273, 1.0
  %v275 = vrcp.pop %v274
  %v276 = vmul.f32 1.0, %v275
  %v277 = vtanh.pop %v270
  %v278 = vmul.f32 %v276, 0.0
  %280 = vrot.lane.b32.xlu0 %v277, 64
  %v281 = vpop.permute.xlu0 %280
  %v283 = vmul.f32 %v276, %v281
  %285 = vrot.lane.b32.xlu0 %v283, 32
  %v286 = vpop.permute.xlu0 %285
  %v288 = vadd.f32 %v278, %v286
  %v289 = vtanh.pop %v288
  %291 = vrot.lane.b32.xlu0 %v289, 64
  %v292 = vpop.permute.xlu0 %291
  %v294 = vmul.f32 %v276, %v292
  %296 = vrot.lane.b32.xlu0 %v294, 32
  %v297 = vpop.permute.xlu0 %296
  %299 = vst.msk [vmem:[#allocation3] sm:$0xff] %vm226, %v297
  %s300 = scalar_lea.vmem [#allocation2], 8
  %v301 = vld [vmem:[%s300] sm:$0xff]
  %v302 = vpack.c.bf16 %v294, %v294
  %304 = vrot.lane.b32.xlu0 %v302, 32
  %v305 = vpop.permute.xlu0 %304
  %v307 = vsel %vm226, %v305, 0
  %309 = vmatprep.subr.bf16.mxu0 0
  %310 = vmatpush1.bf16.msra.mxu0 %v222
  %311 = vmatprep.subr.bf16.mxu0 0
  %312 = vmatpush1.bf16.msra.mxu0 %v223
  %313 = vmatprep.subr.bf16.mxu0 0
  %314 = vmatpush1.bf16.msra.mxu0 0
  %315 = vmatprep.subr.bf16.mxu0 0
  %316 = vmatpush1.bf16.msra.mxu0 0
  %317 = vmatprep.subr.bf16.mxu0 0
  %318 = vmatpush1.bf16.msra.mxu0 0
  %319 = vmatprep.subr.bf16.mxu0 0
  %320 = vmatpush1.bf16.msra.mxu0 0
  %321 = vmatprep.subr.bf16.mxu0 0
  %322 = vmatpush1.bf16.msra.mxu0 0
  %323 = vmatprep.subr.bf16.mxu0 0
  %324 = vmatpush1.bf16.msra.mxu0 0
  %325 = vmatprep.subr.bf16.mxu0 0
  %326 = vmatpush1.bf16.msra.mxu0 0
  %327 = vmatprep.subr.bf16.mxu0 0
  %328 = vmatpush1.bf16.msra.mxu0 0
  %329 = vmatprep.subr.bf16.mxu0 0
  %330 = vmatpush1.bf16.msra.mxu0 0
  %331 = vmatprep.subr.bf16.mxu0 0
  %332 = vmatpush1.bf16.msra.mxu0 0
  %333 = vmatprep.subr.bf16.mxu0 0
  %334 = vmatpush1.bf16.msra.mxu0 0
  %335 = vmatprep.subr.bf16.mxu0 0
  %336 = vmatpush1.bf16.msra.mxu0 0
  %337 = vmatprep.subr.bf16.mxu0 0
  %338 = vmatpush1.bf16.msra.mxu0 0
  %339 = vmatprep.subr.bf16.mxu0 0
  %340 = vmatpush1.bf16.msra.mxu0 0
  %341 = vmatprep.mubr.bf16.mxu0 0
  %342 = vmatmul.mubr.bf16.gmra.mrb[0].mxu0 %v307
  %v343 = vpop.f32.mrb[0].mxu0
  %v344 = vadd.f32 0.0, %v343
  %v345 = vpop.f32.mrb[0].mxu0
  %v346 = vpop.f32.mrb[0].mxu0
  %v347 = vpop.f32.mrb[0].mxu0
  %348 = vdwg.mxu0
  %v349 = vadd.f32 %v301, %v344
  %v350 = vxor.u32 %v349, 2147483648
  %v351 = vmul.f32 %v350, 1.442695
  %v352 = vpow.pop %v351
  %v353 = vadd.f32 %v352, 1.0
  %v354 = vrcp.pop %v353
  %v355 = vmul.f32 1.0, %v354
  %v356 = vtanh.pop %v349
  %v357 = vmul.f32 %v355, %v288
  %359 = vrot.lane.b32.xlu0 %v356, 64
  %v360 = vpop.permute.xlu0 %359
  %v362 = vmul.f32 %v355, %v360
  %364 = vrot.lane.b32.xlu0 %v362, 32
  %v365 = vpop.permute.xlu0 %364
  %v367 = vadd.f32 %v357, %v365
  %v368 = vtanh.pop %v367
  %370 = vrot.lane.b32.xlu0 %v368, 64
  %v371 = vpop.permute.xlu0 %370
  %v373 = vmul.f32 %v355, %v371
  %375 = vrot.lane.b32.xlu0 %v373, 32
  %v376 = vpop.permute.xlu0 %375
  %s378 = scalar_lea.vmem [#allocation3], 8
  %379 = vst.msk [vmem:[%s378] sm:$0xff] %vm226, %v376
  %s380 = scalar_lea.vmem [#allocation2], 16
  %v381 = vld [vmem:[%s380] sm:$0xff]
  %v382 = vpack.c.bf16 %v373, %v373
  %384 = vrot.lane.b32.xlu0 %v382, 32
  %v385 = vpop.permute.xlu0 %384
  %v387 = vsel %vm226, %v385, 0
  %389 = vmatprep.subr.bf16.mxu0 0
  %390 = vmatpush1.bf16.msra.mxu0 %v222
  %391 = vmatprep.subr.bf16.mxu0 0
  %392 = vmatpush1.bf16.msra.mxu0 %v223
  %393 = vmatprep.subr.bf16.mxu0 0
  %394 = vmatpush1.bf16.msra.mxu0 0
  %395 = vmatprep.subr.bf16.mxu0 0
  %396 = vmatpush1.bf16.msra.mxu0 0
  %397 = vmatprep.subr.bf16.mxu0 0
  %398 = vmatpush1.bf16.msra.mxu0 0
  %399 = vmatprep.subr.bf16.mxu0 0
  %400 = vmatpush1.bf16.msra.mxu0 0
  %401 = vmatprep.subr.bf16.mxu0 0
  %402 = vmatpush1.bf16.msra.mxu0 0
  %403 = vmatprep.subr.bf16.mxu0 0
  %404 = vmatpush1.bf16.msra.mxu0 0
  %405 = vmatprep.subr.bf16.mxu0 0
  %406 = vmatpush1.bf16.msra.mxu0 0
  %407 = vmatprep.subr.bf16.mxu0 0
  %408 = vmatpush1.bf16.msra.mxu0 0
  %409 = vmatprep.subr.bf16.mxu0 0
  %410 = vmatpush1.bf16.msra.mxu0 0
  %411 = vmatprep.subr.bf16.mxu0 0
  %412 = vmatpush1.bf16.msra.mxu0 0
  %413 = vmatprep.subr.bf16.mxu0 0
  %414 = vmatpush1.bf16.msra.mxu0 0
  %415 = vmatprep.subr.bf16.mxu0 0
  %416 = vmatpush1.bf16.msra.mxu0 0
  %417 = vmatprep.subr.bf16.mxu0 0
  %418 = vmatpush1.bf16.msra.mxu0 0
  %419 = vmatprep.subr.bf16.mxu0 0
  %420 = vmatpush1.bf16.msra.mxu0 0
  %421 = vmatprep.mubr.bf16.mxu0 0
  %422 = vmatmul.mubr.bf16.gmra.mrb[0].mxu0 %v387
  %v423 = vpop.f32.mrb[0].mxu0
  %v424 = vadd.f32 0.0, %v423
  %v425 = vpop.f32.mrb[0].mxu0
  %v426 = vpop.f32.mrb[0].mxu0
  %v427 = vpop.f32.mrb[0].mxu0
  %428 = vdwg.mxu0
  %v429 = vadd.f32 %v381, %v424
  %v430 = vxor.u32 %v429, 2147483648
  %v431 = vmul.f32 %v430, 1.442695
  %v432 = vpow.pop %v431
  %v433 = vadd.f32 %v432, 1.0
  %v434 = vrcp.pop %v433
  %v435 = vmul.f32 1.0, %v434
  %v436 = vtanh.pop %v429
  %v437 = vmul.f32 %v435, %v367
  %439 = vrot.lane.b32.xlu0 %v436, 64
  %v440 = vpop.permute.xlu0 %439
  %v442 = vmul.f32 %v435, %v440
  %444 = vrot.lane.b32.xlu0 %v442, 32
  %v445 = vpop.permute.xlu0 %444
  %v447 = vadd.f32 %v437, %v445
  %v448 = vtanh.pop %v447
  %450 = vrot.lane.b32.xlu0 %v448, 64
  %v451 = vpop.permute.xlu0 %450
  %v453 = vmul.f32 %v435, %v451
  %455 = vrot.lane.b32.xlu0 %v453, 32
  %v456 = vpop.permute.xlu0 %455
  %s458 = scalar_lea.vmem [#allocation3], 16
  %459 = vst.msk [vmem:[%s458] sm:$0xff] %vm226, %v456
  %s460 = scalar_lea.vmem [#allocation2], 24
  %v461 = vld [vmem:[%s460] sm:$0xff]
  %v462 = vpack.c.bf16 %v453, %v453
  %464 = vrot.lane.b32.xlu0 %v462, 32
  %v465 = vpop.permute.xlu0 %464
  %v467 = vsel %vm226, %v465, 0
  %469 = vmatprep.subr.bf16.mxu0 0
  %470 = vmatpush1.bf16.msra.mxu0 %v222
  %471 = vmatprep.subr.bf16.mxu0 0
  %472 = vmatpush1.bf16.msra.mxu0 %v223
  %473 = vmatprep.subr.bf16.mxu0 0
  %474 = vmatpush1.bf16.msra.mxu0 0
  %475 = vmatprep.subr.bf16.mxu0 0
  %476 = vmatpush1.bf16.msra.mxu0 0
  %477 = vmatprep.subr.bf16.mxu0 0
  %478 = vmatpush1.bf16.msra.mxu0 0
  %479 = vmatprep.subr.bf16.mxu0 0
  %480 = vmatpush1.bf16.msra.mxu0 0
  %481 = vmatprep.subr.bf16.mxu0 0
  %482 = vmatpush1.bf16.msra.mxu0 0
  %483 = vmatprep.subr.bf16.mxu0 0
  %484 = vmatpush1.bf16.msra.mxu0 0
  %485 = vmatprep.subr.bf16.mxu0 0
  %486 = vmatpush1.bf16.msra.mxu0 0
  %487 = vmatprep.subr.bf16.mxu0 0
  %488 = vmatpush1.bf16.msra.mxu0 0
  %489 = vmatprep.subr.bf16.mxu0 0
  %490 = vmatpush1.bf16.msra.mxu0 0
  %491 = vmatprep.subr.bf16.mxu0 0
  %492 = vmatpush1.bf16.msra.mxu0 0
  %493 = vmatprep.subr.bf16.mxu0 0
  %494 = vmatpush1.bf16.msra.mxu0 0
  %495 = vmatprep.subr.bf16.mxu0 0
  %496 = vmatpush1.bf16.msra.mxu0 0
  %497 = vmatprep.subr.bf16.mxu0 0
  %498 = vmatpush1.bf16.msra.mxu0 0
  %499 = vmatprep.subr.bf16.mxu0 0
  %500 = vmatpush1.bf16.msra.mxu0 0
  %501 = vmatprep.mubr.bf16.mxu0 0
  %502 = vmatmul.mubr.bf16.gmra.mrb[0].mxu0 %v467
  %v503 = vpop.f32.mrb[0].mxu0
  %v504 = vadd.f32 0.0, %v503
  %v505 = vpop.f32.mrb[0].mxu0
  %v506 = vpop.f32.mrb[0].mxu0
  %v507 = vpop.f32.mrb[0].mxu0
  %508 = vdwg.mxu0
  %v509 = vadd.f32 %v461, %v504
  %v510 = vxor.u32 %v509, 2147483648
  %v511 = vmul.f32 %v510, 1.442695
  %v512 = vpow.pop %v511
  %v513 = vadd.f32 %v512, 1.0
  %v514 = vrcp.pop %v513
  %v515 = vmul.f32 1.0, %v514
  %v516 = vtanh.pop %v509
  %v517 = vmul.f32 %v515, %v447
  %519 = vrot.lane.b32.xlu0 %v516, 64
  %v520 = vpop.permute.xlu0 %519
  %v522 = vmul.f32 %v515, %v520
  %524 = vrot.lane.b32.xlu0 %v522, 32
  %v525 = vpop.permute.xlu0 %524
  %v527 = vadd.f32 %v517, %v525
  %v528 = vtanh.pop %v527
  %530 = vrot.lane.b32.xlu0 %v528, 64
  %v531 = vpop.permute.xlu0 %530
  %v533 = vmul.f32 %v515, %v531
  %535 = vrot.lane.b32.xlu0 %v533, 32
  %v536 = vpop.permute.xlu0 %535
  %s538 = scalar_lea.vmem [#allocation3], 24
  %539 = vst.msk [vmem:[%s538] sm:$0xff] %vm226, %v536
  %s540 = scalar_lea.vmem [#allocation2], 32
  %v541 = vld [vmem:[%s540] sm:$0xff]
  %v542 = vpack.c.bf16 %v533, %v533
  %544 = vrot.lane.b32.xlu0 %v542, 32
  %v545 = vpop.permute.xlu0 %544
  %v547 = vsel %vm226, %v545, 0
  %549 = vmatprep.subr.bf16.mxu0 0
  %550 = vmatpush1.bf16.msra.mxu0 %v222
  %551 = vmatprep.subr.bf16.mxu0 0
  %552 = vmatpush1.bf16.msra.mxu0 %v223
  %553 = vmatprep.subr.bf16.mxu0 0
  %554 = vmatpush1.bf16.msra.mxu0 0
  %555 = vmatprep.subr.bf16.mxu0 0
  %556 = vmatpush1.bf16.msra.mxu0 0
  %557 = vmatprep.subr.bf16.mxu0 0
  %558 = vmatpush1.bf16.msra.mxu0 0
  %559 = vmatprep.subr.bf16.mxu0 0
  %560 = vmatpush1.bf16.msra.mxu0 0
  %561 = vmatprep.subr.bf16.mxu0 0
  %562 = vmatpush1.bf16.msra.mxu0 0
  %563 = vmatprep.subr.bf16.mxu0 0
  %564 = vmatpush1.bf16.msra.mxu0 0
  %565 = vmatprep.subr.bf16.mxu0 0
  %566 = vmatpush1.bf16.msra.mxu0 0
  %567 = vmatprep.subr.bf16.mxu0 0
  %568 = vmatpush1.bf16.msra.mxu0 0
  %569 = vmatprep.subr.bf16.mxu0 0
  %570 = vmatpush1.bf16.msra.mxu0 0
  %571 = vmatprep.subr.bf16.mxu0 0
  %572 = vmatpush1.bf16.msra.mxu0 0
  %573 = vmatprep.subr.bf16.mxu0 0
  %574 = vmatpush1.bf16.msra.mxu0 0
  %575 = vmatprep.subr.bf16.mxu0 0
  %576 = vmatpush1.bf16.msra.mxu0 0
  %577 = vmatprep.subr.bf16.mxu0 0
  %578 = vmatpush1.bf16.msra.mxu0 0
  %579 = vmatprep.subr.bf16.mxu0 0
  %580 = vmatpush1.bf16.msra.mxu0 0
  %581 = vmatprep.mubr.bf16.mxu0 0
  %582 = vmatmul.mubr.bf16.gmra.mrb[0].mxu0 %v547
  %v583 = vpop.f32.mrb[0].mxu0
  %v584 = vadd.f32 0.0, %v583
  %v585 = vpop.f32.mrb[0].mxu0
  %v586 = vpop.f32.mrb[0].mxu0
  %v587 = vpop.f32.mrb[0].mxu0
  %588 = vdwg.mxu0
  %v589 = vadd.f32 %v541, %v584
  %v590 = vxor.u32 %v589, 2147483648
  %v591 = vmul.f32 %v590, 1.442695
  %v592 = vpow.pop %v591
  %v593 = vadd.f32 %v592, 1.0
  %v594 = vrcp.pop %v593
  %v595 = vmul.f32 1.0, %v594
  %v596 = vtanh.pop %v589
  %v597 = vmul.f32 %v595, %v527
  %599 = vrot.lane.b32.xlu0 %v596, 64
  %v600 = vpop.permute.xlu0 %599
  %v602 = vmul.f32 %v595, %v600
  %604 = vrot.lane.b32.xlu0 %v602, 32
  %v605 = vpop.permute.xlu0 %604
  %v607 = vadd.f32 %v597, %v605
  %v608 = vtanh.pop %v607
  %610 = vrot.lane.b32.xlu0 %v608, 64
  %v611 = vpop.permute.xlu0 %610
  %v613 = vmul.f32 %v595, %v611
  %615 = vrot.lane.b32.xlu0 %v613, 32
  %v616 = vpop.permute.xlu0 %615
  %s618 = scalar_lea.vmem [#allocation3], 32
  %619 = vst.msk [vmem:[%s618] sm:$0xff] %vm226, %v616
  %s620 = scalar_lea.vmem [#allocation2], 40
  %v621 = vld [vmem:[%s620] sm:$0xff]
  %v622 = vpack.c.bf16 %v613, %v613
  %624 = vrot.lane.b32.xlu0 %v622, 32
  %v625 = vpop.permute.xlu0 %624
  %v627 = vsel %vm226, %v625, 0
  %629 = vmatprep.subr.bf16.mxu0 0
  %630 = vmatpush1.bf16.msra.mxu0 %v222
  %631 = vmatprep.subr.bf16.mxu0 0
  %632 = vmatpush1.bf16.msra.mxu0 %v223
  %633 = vmatprep.subr.bf16.mxu0 0
  %634 = vmatpush1.bf16.msra.mxu0 0
  %635 = vmatprep.subr.bf16.mxu0 0
  %636 = vmatpush1.bf16.msra.mxu0 0
  %637 = vmatprep.subr.bf16.mxu0 0
  %638 = vmatpush1.bf16.msra.mxu0 0
  %639 = vmatprep.subr.bf16.mxu0 0
  %640 = vmatpush1.bf16.msra.mxu0 0
  %641 = vmatprep.subr.bf16.mxu0 0
  %642 = vmatpush1.bf16.msra.mxu0 0
  %643 = vmatprep.subr.bf16.mxu0 0
  %644 = vmatpush1.bf16.msra.mxu0 0
  %645 = vmatprep.subr.bf16.mxu0 0
  %646 = vmatpush1.bf16.msra.mxu0 0
  %647 = vmatprep.subr.bf16.mxu0 0
  %648 = vmatpush1.bf16.msra.mxu0 0
  %649 = vmatprep.subr.bf16.mxu0 0
  %650 = vmatpush1.bf16.msra.mxu0 0
  %651 = vmatprep.subr.bf16.mxu0 0
  %652 = vmatpush1.bf16.msra.mxu0 0
  %653 = vmatprep.subr.bf16.mxu0 0
  %654 = vmatpush1.bf16.msra.mxu0 0
  %655 = vmatprep.subr.bf16.mxu0 0
  %656 = vmatpush1.bf16.msra.mxu0 0
  %657 = vmatprep.subr.bf16.mxu0 0
  %658 = vmatpush1.bf16.msra.mxu0 0
  %659 = vmatprep.subr.bf16.mxu0 0
  %660 = vmatpush1.bf16.msra.mxu0 0
  %661 = vmatprep.mubr.bf16.mxu0 0
  %662 = vmatmul.mubr.bf16.gmra.mrb[0].mxu0 %v627
  %v663 = vpop.f32.mrb[0].mxu0
  %v664 = vadd.f32 0.0, %v663
  %v665 = vpop.f32.mrb[0].mxu0
  %v666 = vpop.f32.mrb[0].mxu0
  %v667 = vpop.f32.mrb[0].mxu0
  %668 = vdwg.mxu0
  %v669 = vadd.f32 %v621, %v664
  %v670 = vxor.u32 %v669, 2147483648
  %v671 = vmul.f32 %v670, 1.442695
  %v672 = vpow.pop %v671
  %v673 = vadd.f32 %v672, 1.0
  %v674 = vrcp.pop %v673
  %v675 = vmul.f32 1.0, %v674
  %v676 = vtanh.pop %v669
  %v677 = vmul.f32 %v675, %v607
  %679 = vrot.lane.b32.xlu0 %v676, 64
  %v680 = vpop.permute.xlu0 %679
  %v682 = vmul.f32 %v675, %v680
  %684 = vrot.lane.b32.xlu0 %v682, 32
  %v685 = vpop.permute.xlu0 %684
  %v687 = vadd.f32 %v677, %v685
  %v688 = vtanh.pop %v687
  %690 = vrot.lane.b32.xlu0 %v688, 64
  %v691 = vpop.permute.xlu0 %690
  %v693 = vmul.f32 %v675, %v691
  %695 = vrot.lane.b32.xlu0 %v693, 32
  %v696 = vpop.permute.xlu0 %695
  %s698 = scalar_lea.vmem [#allocation3], 40
  %699 = vst.msk [vmem:[%s698] sm:$0xff] %vm226, %v696
  %s700 = scalar_lea.vmem [#allocation2], 48
  %v701 = vld [vmem:[%s700] sm:$0xff]
  %v702 = vpack.c.bf16 %v693, %v693
  %704 = vrot.lane.b32.xlu0 %v702, 32
  %v705 = vpop.permute.xlu0 %704
  %v707 = vsel %vm226, %v705, 0
  %709 = vmatprep.subr.bf16.mxu0 0
  %710 = vmatpush1.bf16.msra.mxu0 %v222
  %711 = vmatprep.subr.bf16.mxu0 0
  %712 = vmatpush1.bf16.msra.mxu0 %v223
  %713 = vmatprep.subr.bf16.mxu0 0
  %714 = vmatpush1.bf16.msra.mxu0 0
  %715 = vmatprep.subr.bf16.mxu0 0
  %716 = vmatpush1.bf16.msra.mxu0 0
  %717 = vmatprep.subr.bf16.mxu0 0
  %718 = vmatpush1.bf16.msra.mxu0 0
  %719 = vmatprep.subr.bf16.mxu0 0
  %720 = vmatpush1.bf16.msra.mxu0 0
  %721 = vmatprep.subr.bf16.mxu0 0
  %722 = vmatpush1.bf16.msra.mxu0 0
  %723 = vmatprep.subr.bf16.mxu0 0
  %724 = vmatpush1.bf16.msra.mxu0 0
  %725 = vmatprep.subr.bf16.mxu0 0
  %726 = vmatpush1.bf16.msra.mxu0 0
  %727 = vmatprep.subr.bf16.mxu0 0
  %728 = vmatpush1.bf16.msra.mxu0 0
  %729 = vmatprep.subr.bf16.mxu0 0
  %730 = vmatpush1.bf16.msra.mxu0 0
  %731 = vmatprep.subr.bf16.mxu0 0
  %732 = vmatpush1.bf16.msra.mxu0 0
  %733 = vmatprep.subr.bf16.mxu0 0
  %734 = vmatpush1.bf16.msra.mxu0 0
  %735 = vmatprep.subr.bf16.mxu0 0
  %736 = vmatpush1.bf16.msra.mxu0 0
  %737 = vmatprep.subr.bf16.mxu0 0
  %738 = vmatpush1.bf16.msra.mxu0 0
  %739 = vmatprep.subr.bf16.mxu0 0
  %740 = vmatpush1.bf16.msra.mxu0 0
  %741 = vmatprep.mubr.bf16.mxu0 0
  %742 = vmatmul.mubr.bf16.gmra.mrb[0].mxu0 %v707
  %v743 = vpop.f32.mrb[0].mxu0
  %v744 = vadd.f32 0.0, %v743
  %v745 = vpop.f32.mrb[0].mxu0
  %v746 = vpop.f32.mrb[0].mxu0
  %v747 = vpop.f32.mrb[0].mxu0
  %748 = vdwg.mxu0
  %v749 = vadd.f32 %v701, %v744
  %v750 = vxor.u32 %v749, 2147483648
  %v751 = vmul.f32 %v750, 1.442695
  %v752 = vpow.pop %v751
  %v753 = vadd.f32 %v752, 1.0
  %v754 = vrcp.pop %v753
  %v755 = vmul.f32 1.0, %v754
  %v756 = vtanh.pop %v749
  %v757 = vmul.f32 %v755, %v687
  %759 = vrot.lane.b32.xlu0 %v756, 64
  %v760 = vpop.permute.xlu0 %759
  %v762 = vmul.f32 %v755, %v760
  %764 = vrot.lane.b32.xlu0 %v762, 32
  %v765 = vpop.permute.xlu0 %764
  %v767 = vadd.f32 %v757, %v765
  %v768 = vtanh.pop %v767
  %770 = vrot.lane.b32.xlu0 %v768, 64
  %v771 = vpop.permute.xlu0 %770
  %v773 = vmul.f32 %v755, %v771
  %775 = vrot.lane.b32.xlu0 %v773, 32
  %v776 = vpop.permute.xlu0 %775
  %s778 = scalar_lea.vmem [#allocation3], 48
  %779 = vst.msk [vmem:[%s778] sm:$0xff] %vm226, %v776
  %s780 = scalar_lea.vmem [#allocation2], 56
  %v781 = vld [vmem:[%s780] sm:$0xff]
  %v782 = vpack.c.bf16 %v773, %v773
  %784 = vrot.lane.b32.xlu0 %v782, 32
  %v785 = vpop.permute.xlu0 %784
  %v787 = vsel %vm226, %v785, 0
  %789 = vmatprep.subr.bf16.mxu0 0
  %790 = vmatpush1.bf16.msra.mxu0 %v222
  %791 = vmatprep.subr.bf16.mxu0 0
  %792 = vmatpush1.bf16.msra.mxu0 %v223
  %793 = vmatprep.subr.bf16.mxu0 0
  %794 = vmatpush1.bf16.msra.mxu0 0
  %795 = vmatprep.subr.bf16.mxu0 0
  %796 = vmatpush1.bf16.msra.mxu0 0
  %797 = vmatprep.subr.bf16.mxu0 0
  %798 = vmatpush1.bf16.msra.mxu0 0
  %799 = vmatprep.subr.bf16.mxu0 0
  %800 = vmatpush1.bf16.msra.mxu0 0
  %801 = vmatprep.subr.bf16.mxu0 0
  %802 = vmatpush1.bf16.msra.mxu0 0
  %803 = vmatprep.subr.bf16.mxu0 0
  %804 = vmatpush1.bf16.msra.mxu0 0
  %805 = vmatprep.subr.bf16.mxu0 0
  %806 = vmatpush1.bf16.msra.mxu0 0
  %807 = vmatprep.subr.bf16.mxu0 0
  %808 = vmatpush1.bf16.msra.mxu0 0
  %809 = vmatprep.subr.bf16.mxu0 0
  %810 = vmatpush1.bf16.msra.mxu0 0
  %811 = vmatprep.subr.bf16.mxu0 0
  %812 = vmatpush1.bf16.msra.mxu0 0
  %813 = vmatprep.subr.bf16.mxu0 0
  %814 = vmatpush1.bf16.msra.mxu0 0
  %815 = vmatprep.subr.bf16.mxu0 0
  %816 = vmatpush1.bf16.msra.mxu0 0
  %817 = vmatprep.subr.bf16.mxu0 0
  %818 = vmatpush1.bf16.msra.mxu0 0
  %819 = vmatprep.subr.bf16.mxu0 0
  %820 = vmatpush1.bf16.msra.mxu0 0
  %821 = vmatprep.mubr.bf16.mxu0 0
  %822 = vmatmul.mubr.bf16.gmra.mrb[0].mxu0 %v787
  %v823 = vpop.f32.mrb[0].mxu0
  %v824 = vadd.f32 0.0, %v823
  %v825 = vpop.f32.mrb[0].mxu0
  %v826 = vpop.f32.mrb[0].mxu0
  %v827 = vpop.f32.mrb[0].mxu0
  %828 = vdwg.mxu0
  %v829 = vadd.f32 %v781, %v824
  %v830 = vxor.u32 %v829, 2147483648
  %v831 = vmul.f32 %v830, 1.442695
  %v832 = vpow.pop %v831
  %v833 = vadd.f32 %v832, 1.0
  %v834 = vrcp.pop %v833
  %v835 = vmul.f32 1.0, %v834
  %v836 = vtanh.pop %v829
  %v837 = vmul.f32 %v835, %v767
  %839 = vrot.lane.b32.xlu0 %v836, 64
  %v840 = vpop.permute.xlu0 %839
  %v842 = vmul.f32 %v835, %v840
  %844 = vrot.lane.b32.xlu0 %v842, 32
  %v845 = vpop.permute.xlu0 %844
  %v847 = vadd.f32 %v837, %v845
  %v848 = vtanh.pop %v847
  %850 = vrot.lane.b32.xlu0 %v848, 64
  %v851 = vpop.permute.xlu0 %850
  %v853 = vmul.f32 %v835, %v851
  %855 = vrot.lane.b32.xlu0 %v853, 32
  %v856 = vpop.permute.xlu0 %855
  %s858 = scalar_lea.vmem [#allocation3], 56
  %859 = vst.msk [vmem:[%s858] sm:$0xff] %vm226, %v856
  %v860 = vld [vmem:[#allocation3] sm:$0xff]
  %v861 = vld [vmem:[#allocation3 + $0x8] sm:$0xff]
  %v862 = vld [vmem:[#allocation3 + $0x10] sm:$0xff]
  %v863 = vld [vmem:[#allocation3 + $0x18] sm:$0xff]
  %v864 = vld [vmem:[#allocation3 + $0x20] sm:$0xff]
  %v865 = vld [vmem:[#allocation3 + $0x28] sm:$0xff]
  %v866 = vld [vmem:[#allocation3 + $0x30] sm:$0xff]
  %v867 = vld [vmem:[#allocation3 + $0x38] sm:$0xff]
  %v868 = vpack.c.bf16 %v861, %v860
  %v869 = vpack.c.bf16 %v863, %v862
  %v870 = vpack.c.bf16 %v865, %v864
  %v871 = vpack.c.bf16 %v867, %v866
  %v872 = vld [vmem:[%s4] sm:$0xf]
  %v873 = vld [vmem:[%s4 + $0x4] sm:$0xf]
  %v874 = vld [vmem:[%s4 + $0x8] sm:$0xf]
  %v875 = vld [vmem:[%s4 + $0xc] sm:$0xf]
  %v876 = vld [vmem:[%s6] sm:$0x1]
  %v878 = vlaneseq
  %v879 = vshrl.u32 %v878, 7
  %v880 = vsub.s32 0, %v879
  %v881 = vrot.slane %v876, %v880
  %v887 = vunpack.c.l.b16 %v872
  %v888 = vunpack.c.l.b16 %v873
  %v889 = vunpack.c.l.b16 %v874
  %v890 = vunpack.c.l.b16 %v875
  %v891 = vpack.c.b16 %v888, %v887
  %v892 = vpack.c.b16 %v890, %v889
  %v896 = vsel %vm226, %v868, 0
  %v899 = vsel %vm226, %v869, 0
  %v902 = vsel %vm226, %v870, 0
  %v905 = vsel %vm226, %v871, 0
  %907 = vmatprep.subr.bf16.mxu0 0
  %908 = vmatpush1.bf16.msra.mxu0 %v891
  %909 = vmatprep.subr.bf16.mxu0 0
  %910 = vmatpush1.bf16.msra.mxu0 %v892
  %911 = vmatprep.subr.bf16.mxu0 0
  %912 = vmatpush1.bf16.msra.mxu0 0
  %913 = vmatprep.subr.bf16.mxu0 0
  %914 = vmatpush1.bf16.msra.mxu0 0
  %915 = vmatprep.subr.bf16.mxu0 0
  %916 = vmatpush1.bf16.msra.mxu0 0
  %917 = vmatprep.subr.bf16.mxu0 0
  %918 = vmatpush1.bf16.msra.mxu0 0
  %919 = vmatprep.subr.bf16.mxu0 0
  %920 = vmatpush1.bf16.msra.mxu0 0
  %921 = vmatprep.subr.bf16.mxu0 0
  %922 = vmatpush1.bf16.msra.mxu0 0
  %923 = vmatprep.subr.bf16.mxu0 0
  %924 = vmatpush1.bf16.msra.mxu0 0
  %925 = vmatprep.subr.bf16.mxu0 0
  %926 = vmatpush1.bf16.msra.mxu0 0
  %927 = vmatprep.subr.bf16.mxu0 0
  %928 = vmatpush1.bf16.msra.mxu0 0
  %929 = vmatprep.subr.bf16.mxu0 0
  %930 = vmatpush1.bf16.msra.mxu0 0
  %931 = vmatprep.subr.bf16.mxu0 0
  %932 = vmatpush1.bf16.msra.mxu0 0
  %933 = vmatprep.subr.bf16.mxu0 0
  %934 = vmatpush1.bf16.msra.mxu0 0
  %935 = vmatprep.subr.bf16.mxu0 0
  %936 = vmatpush1.bf16.msra.mxu0 0
  %937 = vmatprep.subr.bf16.mxu0 0
  %938 = vmatpush1.bf16.msra.mxu0 0
  %939 = vmatprep.mubr.bf16.mxu0 0
  %940 = vmatmul.mubr.bf16.gmra.mrb[0].mxu0 %v896
  %v941 = vpop.f32.mrb[0].mxu0
  %v942 = vadd.f32 %v881, %v941
  %v943 = vpop.f32.mrb[0].mxu0
  %v944 = vpop.f32.mrb[0].mxu0
  %v945 = vadd.f32 %v881, %v944
  %v946 = vpop.f32.mrb[0].mxu0
  %947 = vmatprep.mubr.bf16.mxu0 0
  %948 = vmatmul.mubr.bf16.gmra.mrb[0].mxu0 %v899
  %v949 = vpop.f32.mrb[0].mxu0
  %v950 = vadd.f32 %v881, %v949
  %v951 = vpop.f32.mrb[0].mxu0
  %v952 = vpop.f32.mrb[0].mxu0
  %v953 = vadd.f32 %v881, %v952
  %v954 = vpop.f32.mrb[0].mxu0
  %955 = vmatprep.mubr.bf16.mxu0 0
  %956 = vmatmul.mubr.bf16.gmra.mrb[0].mxu0 %v902
  %v957 = vpop.f32.mrb[0].mxu0
  %v958 = vadd.f32 %v881, %v957
  %v959 = vpop.f32.mrb[0].mxu0
  %v960 = vpop.f32.mrb[0].mxu0
  %v961 = vadd.f32 %v881, %v960
  %v962 = vpop.f32.mrb[0].mxu0
  %963 = vmatprep.mubr.bf16.mxu0 0
  %964 = vmatmul.mubr.bf16.gmra.mrb[0].mxu0 %v905
  %v965 = vpop.f32.mrb[0].mxu0
  %v966 = vadd.f32 %v881, %v965
  %v967 = vpop.f32.mrb[0].mxu0
  %v968 = vpop.f32.mrb[0].mxu0
  %v969 = vadd.f32 %v881, %v968
  %v970 = vpop.f32.mrb[0].mxu0
  %971 = vdwg.mxu0
  %972 = vst [vmem:[#allocation2] sm:$0xff] %v942
  %973 = vst [vmem:[#allocation2 + $0x8] sm:$0xff] %v945
  %974 = vst [vmem:[#allocation2 + $0x10] sm:$0xff] %v950
  %975 = vst [vmem:[#allocation2 + $0x18] sm:$0xff] %v953
  %976 = vst [vmem:[#allocation2 + $0x20] sm:$0xff] %v958
  %977 = vst [vmem:[#allocation2 + $0x28] sm:$0xff] %v961
  %978 = vst [vmem:[#allocation2 + $0x30] sm:$0xff] %v966
  %979 = vst [vmem:[#allocation2 + $0x38] sm:$0xff] %v969
  %v980 = vld [vmem:[%s5] sm:$0xf]
  %v981 = vld [vmem:[%s5 + $0x4] sm:$0xf]
  %v982 = vld [vmem:[%s5 + $0x8] sm:$0xf]
  %v983 = vld [vmem:[%s5 + $0xc] sm:$0xf]
  %v984 = vld [vmem:[#allocation2] sm:$0xff]
  %v989 = vunpack.c.l.b16 %v980
  %v990 = vunpack.c.l.b16 %v981
  %v991 = vunpack.c.l.b16 %v982
  %v992 = vunpack.c.l.b16 %v983
  %v993 = vpack.c.b16 %v990, %v989
  %v994 = vpack.c.b16 %v992, %v991
  %997 = vmatprep.subr.bf16.mxu0 0
  %998 = vmatpush1.bf16.msra.mxu0 %v993
  %999 = vmatprep.subr.bf16.mxu0 0
  %1000 = vmatpush1.bf16.msra.mxu0 %v994
  %1001 = vmatprep.subr.bf16.mxu0 0
  %1002 = vmatpush1.bf16.msra.mxu0 0
  %1003 = vmatprep.subr.bf16.mxu0 0
  %1004 = vmatpush1.bf16.msra.mxu0 0
  %1005 = vmatprep.subr.bf16.mxu0 0
  %1006 = vmatpush1.bf16.msra.mxu0 0
  %1007 = vmatprep.subr.bf16.mxu0 0
  %1008 = vmatpush1.bf16.msra.mxu0 0
  %1009 = vmatprep.subr.bf16.mxu0 0
  %1010 = vmatpush1.bf16.msra.mxu0 0
  %1011 = vmatprep.subr.bf16.mxu0 0
  %1012 = vmatpush1.bf16.msra.mxu0 0
  %1013 = vmatprep.subr.bf16.mxu0 0
  %1014 = vmatpush1.bf16.msra.mxu0 0
  %1015 = vmatprep.subr.bf16.mxu0 0
  %1016 = vmatpush1.bf16.msra.mxu0 0
  %1017 = vmatprep.subr.bf16.mxu0 0
  %1018 = vmatpush1.bf16.msra.mxu0 0
  %1019 = vmatprep.subr.bf16.mxu0 0
  %1020 = vmatpush1.bf16.msra.mxu0 0
  %1021 = vmatprep.subr.bf16.mxu0 0
  %1022 = vmatpush1.bf16.msra.mxu0 0
  %1023 = vmatprep.subr.bf16.mxu0 0
  %1024 = vmatpush1.bf16.msra.mxu0 0
  %1025 = vmatprep.subr.bf16.mxu0 0
  %1026 = vmatpush1.bf16.msra.mxu0 0
  %1027 = vmatprep.subr.bf16.mxu0 0
  %1028 = vmatpush1.bf16.msra.mxu0 0
  %1029 = vmatprep.mubr.bf16.mxu0 0
  %1030 = vmatmul.mubr.bf16.gmra.mrb[0].mxu0 %v228
  %v1031 = vpop.f32.mrb[0].mxu0
  %v1032 = vadd.f32 0.0, %v1031
  %v1033 = vpop.f32.mrb[0].mxu0
  %v1034 = vpop.f32.mrb[0].mxu0
  %v1035 = vpop.f32.mrb[0].mxu0
  %1036 = vdwg.mxu0
  %v1037 = vadd.f32 %v984, %v1032
  %v1038 = vxor.u32 %v1037, 2147483648
  %v1039 = vmul.f32 %v1038, 1.442695
  %v1040 = vpow.pop %v1039
  %v1041 = vadd.f32 %v1040, 1.0
  %v1042 = vrcp.pop %v1041
  %v1043 = vmul.f32 1.0, %v1042
  %v1044 = vtanh.pop %v1037
  %v1045 = vmul.f32 %v1043, 0.0
  %1047 = vrot.lane.b32.xlu0 %v1044, 64
  %v1048 = vpop.permute.xlu0 %1047
  %v1050 = vmul.f32 %v1043, %v1048
  %1052 = vrot.lane.b32.xlu0 %v1050, 32
  %v1053 = vpop.permute.xlu0 %1052
  %v1055 = vadd.f32 %v1045, %v1053
  %v1056 = vtanh.pop %v1055
  %1058 = vrot.lane.b32.xlu0 %v1056, 64
  %v1059 = vpop.permute.xlu0 %1058
  %v1061 = vmul.f32 %v1043, %v1059
  %v1062 = vld [vmem:[%s300] sm:$0xff]
  %v1063 = vpack.c.bf16 %v1061, %v1061
  %1065 = vrot.lane.b32.xlu0 %v1063, 32
  %v1066 = vpop.permute.xlu0 %1065
  %v1068 = vsel %vm226, %v1066, 0
  %1070 = vmatprep.subr.bf16.mxu0 0
  %1071 = vmatpush1.bf16.msra.mxu0 %v993
  %1072 = vmatprep.subr.bf16.mxu0 0
  %1073 = vmatpush1.bf16.msra.mxu0 %v994
  %1074 = vmatprep.subr.bf16.mxu0 0
  %1075 = vmatpush1.bf16.msra.mxu0 0
  %1076 = vmatprep.subr.bf16.mxu0 0
  %1077 = vmatpush1.bf16.msra.mxu0 0
  %1078 = vmatprep.subr.bf16.mxu0 0
  %1079 = vmatpush1.bf16.msra.mxu0 0
  %1080 = vmatprep.subr.bf16.mxu0 0
  %1081 = vmatpush1.bf16.msra.mxu0 0
  %1082 = vmatprep.subr.bf16.mxu0 0
  %1083 = vmatpush1.bf16.msra.mxu0 0
  %1084 = vmatprep.subr.bf16.mxu0 0
  %1085 = vmatpush1.bf16.msra.mxu0 0
  %1086 = vmatprep.subr.bf16.mxu0 0
  %1087 = vmatpush1.bf16.msra.mxu0 0
  %1088 = vmatprep.subr.bf16.mxu0 0
  %1089 = vmatpush1.bf16.msra.mxu0 0
  %1090 = vmatprep.subr.bf16.mxu0 0
  %1091 = vmatpush1.bf16.msra.mxu0 0
  %1092 = vmatprep.subr.bf16.mxu0 0
  %1093 = vmatpush1.bf16.msra.mxu0 0
  %1094 = vmatprep.subr.bf16.mxu0 0
  %1095 = vmatpush1.bf16.msra.mxu0 0
  %1096 = vmatprep.subr.bf16.mxu0 0
  %1097 = vmatpush1.bf16.msra.mxu0 0
  %1098 = vmatprep.subr.bf16.mxu0 0
  %1099 = vmatpush1.bf16.msra.mxu0 0
  %1100 = vmatprep.subr.bf16.mxu0 0
  %1101 = vmatpush1.bf16.msra.mxu0 0
  %1102 = vmatprep.mubr.bf16.mxu0 0
  %1103 = vmatmul.mubr.bf16.gmra.mrb[0].mxu0 %v1068
  %v1104 = vpop.f32.mrb[0].mxu0
  %v1105 = vadd.f32 0.0, %v1104
  %v1106 = vpop.f32.mrb[0].mxu0
  %v1107 = vpop.f32.mrb[0].mxu0
  %v1108 = vpop.f32.mrb[0].mxu0
  %1109 = vdwg.mxu0
  %v1110 = vadd.f32 %v1062, %v1105
  %v1111 = vxor.u32 %v1110, 2147483648
  %v1112 = vmul.f32 %v1111, 1.442695
  %v1113 = vpow.pop %v1112
  %v1114 = vadd.f32 %v1113, 1.0
  %v1115 = vrcp.pop %v1114
  %v1116 = vmul.f32 1.0, %v1115
  %v1117 = vtanh.pop %v1110
  %v1118 = vmul.f32 %v1116, %v1055
  %1120 = vrot.lane.b32.xlu0 %v1117, 64
  %v1121 = vpop.permute.xlu0 %1120
  %v1123 = vmul.f32 %v1116, %v1121
  %1125 = vrot.lane.b32.xlu0 %v1123, 32
  %v1126 = vpop.permute.xlu0 %1125
  %v1128 = vadd.f32 %v1118, %v1126
  %v1129 = vtanh.pop %v1128
  %1131 = vrot.lane.b32.xlu0 %v1129, 64
  %v1132 = vpop.permute.xlu0 %1131
  %v1134 = vmul.f32 %v1116, %v1132
  %v1135 = vld [vmem:[%s380] sm:$0xff]
  %v1136 = vpack.c.bf16 %v1134, %v1134
  %1138 = vrot.lane.b32.xlu0 %v1136, 32
  %v1139 = vpop.permute.xlu0 %1138
  %v1141 = vsel %vm226, %v1139, 0
  %1143 = vmatprep.subr.bf16.mxu0 0
  %1144 = vmatpush1.bf16.msra.mxu0 %v993
  %1145 = vmatprep.subr.bf16.mxu0 0
  %1146 = vmatpush1.bf16.msra.mxu0 %v994
  %1147 = vmatprep.subr.bf16.mxu0 0
  %1148 = vmatpush1.bf16.msra.mxu0 0
  %1149 = vmatprep.subr.bf16.mxu0 0
  %1150 = vmatpush1.bf16.msra.mxu0 0
  %1151 = vmatprep.subr.bf16.mxu0 0
  %1152 = vmatpush1.bf16.msra.mxu0 0
  %1153 = vmatprep.subr.bf16.mxu0 0
  %1154 = vmatpush1.bf16.msra.mxu0 0
  %1155 = vmatprep.subr.bf16.mxu0 0
  %1156 = vmatpush1.bf16.msra.mxu0 0
  %1157 = vmatprep.subr.bf16.mxu0 0
  %1158 = vmatpush1.bf16.msra.mxu0 0
  %1159 = vmatprep.subr.bf16.mxu0 0
  %1160 = vmatpush1.bf16.msra.mxu0 0
  %1161 = vmatprep.subr.bf16.mxu0 0
  %1162 = vmatpush1.bf16.msra.mxu0 0
  %1163 = vmatprep.subr.bf16.mxu0 0
  %1164 = vmatpush1.bf16.msra.mxu0 0
  %1165 = vmatprep.subr.bf16.mxu0 0
  %1166 = vmatpush1.bf16.msra.mxu0 0
  %1167 = vmatprep.subr.bf16.mxu0 0
  %1168 = vmatpush1.bf16.msra.mxu0 0
  %1169 = vmatprep.subr.bf16.mxu0 0
  %1170 = vmatpush1.bf16.msra.mxu0 0
  %1171 = vmatprep.subr.bf16.mxu0 0
  %1172 = vmatpush1.bf16.msra.mxu0 0
  %1173 = vmatprep.subr.bf16.mxu0 0
  %1174 = vmatpush1.bf16.msra.mxu0 0
  %1175 = vmatprep.mubr.bf16.mxu0 0
  %1176 = vmatmul.mubr.bf16.gmra.mrb[0].mxu0 %v1141
  %v1177 = vpop.f32.mrb[0].mxu0
  %v1178 = vadd.f32 0.0, %v1177
  %v1179 = vpop.f32.mrb[0].mxu0
  %v1180 = vpop.f32.mrb[0].mxu0
  %v1181 = vpop.f32.mrb[0].mxu0
  %1182 = vdwg.mxu0
  %v1183 = vadd.f32 %v1135, %v1178
  %v1184 = vxor.u32 %v1183, 2147483648
  %v1185 = vmul.f32 %v1184, 1.442695
  %v1186 = vpow.pop %v1185
  %v1187 = vadd.f32 %v1186, 1.0
  %v1188 = vrcp.pop %v1187
  %v1189 = vmul.f32 1.0, %v1188
  %v1190 = vtanh.pop %v1183
  %v1191 = vmul.f32 %v1189, %v1128
  %1193 = vrot.lane.b32.xlu0 %v1190, 64
  %v1194 = vpop.permute.xlu0 %1193
  %v1196 = vmul.f32 %v1189, %v1194
  %1198 = vrot.lane.b32.xlu0 %v1196, 32
  %v1199 = vpop.permute.xlu0 %1198
  %v1201 = vadd.f32 %v1191, %v1199
  %v1202 = vtanh.pop %v1201
  %1204 = vrot.lane.b32.xlu0 %v1202, 64
  %v1205 = vpop.permute.xlu0 %1204
  %v1207 = vmul.f32 %v1189, %v1205
  %v1208 = vld [vmem:[%s460] sm:$0xff]
  %v1209 = vpack.c.bf16 %v1207, %v1207
  %1211 = vrot.lane.b32.xlu0 %v1209, 32
  %v1212 = vpop.permute.xlu0 %1211
  %v1214 = vsel %vm226, %v1212, 0
  %1216 = vmatprep.subr.bf16.mxu0 0
  %1217 = vmatpush1.bf16.msra.mxu0 %v993
  %1218 = vmatprep.subr.bf16.mxu0 0
  %1219 = vmatpush1.bf16.msra.mxu0 %v994
  %1220 = vmatprep.subr.bf16.mxu0 0
  %1221 = vmatpush1.bf16.msra.mxu0 0
  %1222 = vmatprep.subr.bf16.mxu0 0
  %1223 = vmatpush1.bf16.msra.mxu0 0
  %1224 = vmatprep.subr.bf16.mxu0 0
  %1225 = vmatpush1.bf16.msra.mxu0 0
  %1226 = vmatprep.subr.bf16.mxu0 0
  %1227 = vmatpush1.bf16.msra.mxu0 0
  %1228 = vmatprep.subr.bf16.mxu0 0
  %1229 = vmatpush1.bf16.msra.mxu0 0
  %1230 = vmatprep.subr.bf16.mxu0 0
  %1231 = vmatpush1.bf16.msra.mxu0 0
  %1232 = vmatprep.subr.bf16.mxu0 0
  %1233 = vmatpush1.bf16.msra.mxu0 0
  %1234 = vmatprep.subr.bf16.mxu0 0
  %1235 = vmatpush1.bf16.msra.mxu0 0
  %1236 = vmatprep.subr.bf16.mxu0 0
  %1237 = vmatpush1.bf16.msra.mxu0 0
  %1238 = vmatprep.subr.bf16.mxu0 0
  %1239 = vmatpush1.bf16.msra.mxu0 0
  %1240 = vmatprep.subr.bf16.mxu0 0
  %1241 = vmatpush1.bf16.msra.mxu0 0
  %1242 = vmatprep.subr.bf16.mxu0 0
  %1243 = vmatpush1.bf16.msra.mxu0 0
  %1244 = vmatprep.subr.bf16.mxu0 0
  %1245 = vmatpush1.bf16.msra.mxu0 0
  %1246 = vmatprep.subr.bf16.mxu0 0
  %1247 = vmatpush1.bf16.msra.mxu0 0
  %1248 = vmatprep.mubr.bf16.mxu0 0
  %1249 = vmatmul.mubr.bf16.gmra.mrb[0].mxu0 %v1214
  %v1250 = vpop.f32.mrb[0].mxu0
  %v1251 = vadd.f32 0.0, %v1250
  %v1252 = vpop.f32.mrb[0].mxu0
  %v1253 = vpop.f32.mrb[0].mxu0
  %v1254 = vpop.f32.mrb[0].mxu0
  %1255 = vdwg.mxu0
  %v1256 = vadd.f32 %v1208, %v1251
  %v1257 = vxor.u32 %v1256, 2147483648
  %v1258 = vmul.f32 %v1257, 1.442695
  %v1259 = vpow.pop %v1258
  %v1260 = vadd.f32 %v1259, 1.0
  %v1261 = vrcp.pop %v1260
  %v1262 = vmul.f32 1.0, %v1261
  %v1263 = vtanh.pop %v1256
  %v1264 = vmul.f32 %v1262, %v1201
  %1266 = vrot.lane.b32.xlu0 %v1263, 64
  %v1267 = vpop.permute.xlu0 %1266
  %v1269 = vmul.f32 %v1262, %v1267
  %1271 = vrot.lane.b32.xlu0 %v1269, 32
  %v1272 = vpop.permute.xlu0 %1271
  %v1274 = vadd.f32 %v1264, %v1272
  %v1275 = vtanh.pop %v1274
  %1277 = vrot.lane.b32.xlu0 %v1275, 64
  %v1278 = vpop.permute.xlu0 %1277
  %v1280 = vmul.f32 %v1262, %v1278
  %v1281 = vld [vmem:[%s540] sm:$0xff]
  %v1282 = vpack.c.bf16 %v1280, %v1280
  %1284 = vrot.lane.b32.xlu0 %v1282, 32
  %v1285 = vpop.permute.xlu0 %1284
  %v1287 = vsel %vm226, %v1285, 0
  %1289 = vmatprep.subr.bf16.mxu0 0
  %1290 = vmatpush1.bf16.msra.mxu0 %v993
  %1291 = vmatprep.subr.bf16.mxu0 0
  %1292 = vmatpush1.bf16.msra.mxu0 %v994
  %1293 = vmatprep.subr.bf16.mxu0 0
  %1294 = vmatpush1.bf16.msra.mxu0 0
  %1295 = vmatprep.subr.bf16.mxu0 0
  %1296 = vmatpush1.bf16.msra.mxu0 0
  %1297 = vmatprep.subr.bf16.mxu0 0
  %1298 = vmatpush1.bf16.msra.mxu0 0
  %1299 = vmatprep.subr.bf16.mxu0 0
  %1300 = vmatpush1.bf16.msra.mxu0 0
  %1301 = vmatprep.subr.bf16.mxu0 0
  %1302 = vmatpush1.bf16.msra.mxu0 0
  %1303 = vmatprep.subr.bf16.mxu0 0
  %1304 = vmatpush1.bf16.msra.mxu0 0
  %1305 = vmatprep.subr.bf16.mxu0 0
  %1306 = vmatpush1.bf16.msra.mxu0 0
  %1307 = vmatprep.subr.bf16.mxu0 0
  %1308 = vmatpush1.bf16.msra.mxu0 0
  %1309 = vmatprep.subr.bf16.mxu0 0
  %1310 = vmatpush1.bf16.msra.mxu0 0
  %1311 = vmatprep.subr.bf16.mxu0 0
  %1312 = vmatpush1.bf16.msra.mxu0 0
  %1313 = vmatprep.subr.bf16.mxu0 0
  %1314 = vmatpush1.bf16.msra.mxu0 0
  %1315 = vmatprep.subr.bf16.mxu0 0
  %1316 = vmatpush1.bf16.msra.mxu0 0
  %1317 = vmatprep.subr.bf16.mxu0 0
  %1318 = vmatpush1.bf16.msra.mxu0 0
  %1319 = vmatprep.subr.bf16.mxu0 0
  %1320 = vmatpush1.bf16.msra.mxu0 0
  %1321 = vmatprep.mubr.bf16.mxu0 0
  %1322 = vmatmul.mubr.bf16.gmra.mrb[0].mxu0 %v1287
  %v1323 = vpop.f32.mrb[0].mxu0
  %v1324 = vadd.f32 0.0, %v1323
  %v1325 = vpop.f32.mrb[0].mxu0
  %v1326 = vpop.f32.mrb[0].mxu0
  %v1327 = vpop.f32.mrb[0].mxu0
  %1328 = vdwg.mxu0
  %v1329 = vadd.f32 %v1281, %v1324
  %v1330 = vxor.u32 %v1329, 2147483648
  %v1331 = vmul.f32 %v1330, 1.442695
  %v1332 = vpow.pop %v1331
  %v1333 = vadd.f32 %v1332, 1.0
  %v1334 = vrcp.pop %v1333
  %v1335 = vmul.f32 1.0, %v1334
  %v1336 = vtanh.pop %v1329
  %v1337 = vmul.f32 %v1335, %v1274
  %1339 = vrot.lane.b32.xlu0 %v1336, 64
  %v1340 = vpop.permute.xlu0 %1339
  %v1342 = vmul.f32 %v1335, %v1340
  %1344 = vrot.lane.b32.xlu0 %v1342, 32
  %v1345 = vpop.permute.xlu0 %1344
  %v1347 = vadd.f32 %v1337, %v1345
  %v1348 = vtanh.pop %v1347
  %1350 = vrot.lane.b32.xlu0 %v1348, 64
  %v1351 = vpop.permute.xlu0 %1350
  %v1353 = vmul.f32 %v1335, %v1351
  %v1354 = vld [vmem:[%s620] sm:$0xff]
  %v1355 = vpack.c.bf16 %v1353, %v1353
  %1357 = vrot.lane.b32.xlu0 %v1355, 32
  %v1358 = vpop.permute.xlu0 %1357
  %v1360 = vsel %vm226, %v1358, 0
  %1362 = vmatprep.subr.bf16.mxu0 0
  %1363 = vmatpush1.bf16.msra.mxu0 %v993
  %1364 = vmatprep.subr.bf16.mxu0 0
  %1365 = vmatpush1.bf16.msra.mxu0 %v994
  %1366 = vmatprep.subr.bf16.mxu0 0
  %1367 = vmatpush1.bf16.msra.mxu0 0
  %1368 = vmatprep.subr.bf16.mxu0 0
  %1369 = vmatpush1.bf16.msra.mxu0 0
  %1370 = vmatprep.subr.bf16.mxu0 0
  %1371 = vmatpush1.bf16.msra.mxu0 0
  %1372 = vmatprep.subr.bf16.mxu0 0
  %1373 = vmatpush1.bf16.msra.mxu0 0
  %1374 = vmatprep.subr.bf16.mxu0 0
  %1375 = vmatpush1.bf16.msra.mxu0 0
  %1376 = vmatprep.subr.bf16.mxu0 0
  %1377 = vmatpush1.bf16.msra.mxu0 0
  %1378 = vmatprep.subr.bf16.mxu0 0
  %1379 = vmatpush1.bf16.msra.mxu0 0
  %1380 = vmatprep.subr.bf16.mxu0 0
  %1381 = vmatpush1.bf16.msra.mxu0 0
  %1382 = vmatprep.subr.bf16.mxu0 0
  %1383 = vmatpush1.bf16.msra.mxu0 0
  %1384 = vmatprep.subr.bf16.mxu0 0
  %1385 = vmatpush1.bf16.msra.mxu0 0
  %1386 = vmatprep.subr.bf16.mxu0 0
  %1387 = vmatpush1.bf16.msra.mxu0 0
  %1388 = vmatprep.subr.bf16.mxu0 0
  %1389 = vmatpush1.bf16.msra.mxu0 0
  %1390 = vmatprep.subr.bf16.mxu0 0
  %1391 = vmatpush1.bf16.msra.mxu0 0
  %1392 = vmatprep.subr.bf16.mxu0 0
  %1393 = vmatpush1.bf16.msra.mxu0 0
  %1394 = vmatprep.mubr.bf16.mxu0 0
  %1395 = vmatmul.mubr.bf16.gmra.mrb[0].mxu0 %v1360
  %v1396 = vpop.f32.mrb[0].mxu0
  %v1397 = vadd.f32 0.0, %v1396
  %v1398 = vpop.f32.mrb[0].mxu0
  %v1399 = vpop.f32.mrb[0].mxu0
  %v1400 = vpop.f32.mrb[0].mxu0
  %1401 = vdwg.mxu0
  %v1402 = vadd.f32 %v1354, %v1397
  %v1403 = vxor.u32 %v1402, 2147483648
  %v1404 = vmul.f32 %v1403, 1.442695
  %v1405 = vpow.pop %v1404
  %v1406 = vadd.f32 %v1405, 1.0
  %v1407 = vrcp.pop %v1406
  %v1408 = vmul.f32 1.0, %v1407
  %v1409 = vtanh.pop %v1402
  %v1410 = vmul.f32 %v1408, %v1347
  %1412 = vrot.lane.b32.xlu0 %v1409, 64
  %v1413 = vpop.permute.xlu0 %1412
  %v1415 = vmul.f32 %v1408, %v1413
  %1417 = vrot.lane.b32.xlu0 %v1415, 32
  %v1418 = vpop.permute.xlu0 %1417
  %v1420 = vadd.f32 %v1410, %v1418
  %v1421 = vtanh.pop %v1420
  %1423 = vrot.lane.b32.xlu0 %v1421, 64
  %v1424 = vpop.permute.xlu0 %1423
  %v1426 = vmul.f32 %v1408, %v1424
  %v1427 = vld [vmem:[%s700] sm:$0xff]
  %v1428 = vpack.c.bf16 %v1426, %v1426
  %1430 = vrot.lane.b32.xlu0 %v1428, 32
  %v1431 = vpop.permute.xlu0 %1430
  %v1433 = vsel %vm226, %v1431, 0
  %1435 = vmatprep.subr.bf16.mxu0 0
  %1436 = vmatpush1.bf16.msra.mxu0 %v993
  %1437 = vmatprep.subr.bf16.mxu0 0
  %1438 = vmatpush1.bf16.msra.mxu0 %v994
  %1439 = vmatprep.subr.bf16.mxu0 0
  %1440 = vmatpush1.bf16.msra.mxu0 0
  %1441 = vmatprep.subr.bf16.mxu0 0
  %1442 = vmatpush1.bf16.msra.mxu0 0
  %1443 = vmatprep.subr.bf16.mxu0 0
  %1444 = vmatpush1.bf16.msra.mxu0 0
  %1445 = vmatprep.subr.bf16.mxu0 0
  %1446 = vmatpush1.bf16.msra.mxu0 0
  %1447 = vmatprep.subr.bf16.mxu0 0
  %1448 = vmatpush1.bf16.msra.mxu0 0
  %1449 = vmatprep.subr.bf16.mxu0 0
  %1450 = vmatpush1.bf16.msra.mxu0 0
  %1451 = vmatprep.subr.bf16.mxu0 0
  %1452 = vmatpush1.bf16.msra.mxu0 0
  %1453 = vmatprep.subr.bf16.mxu0 0
  %1454 = vmatpush1.bf16.msra.mxu0 0
  %1455 = vmatprep.subr.bf16.mxu0 0
  %1456 = vmatpush1.bf16.msra.mxu0 0
  %1457 = vmatprep.subr.bf16.mxu0 0
  %1458 = vmatpush1.bf16.msra.mxu0 0
  %1459 = vmatprep.subr.bf16.mxu0 0
  %1460 = vmatpush1.bf16.msra.mxu0 0
  %1461 = vmatprep.subr.bf16.mxu0 0
  %1462 = vmatpush1.bf16.msra.mxu0 0
  %1463 = vmatprep.subr.bf16.mxu0 0
  %1464 = vmatpush1.bf16.msra.mxu0 0
  %1465 = vmatprep.subr.bf16.mxu0 0
  %1466 = vmatpush1.bf16.msra.mxu0 0
  %1467 = vmatprep.mubr.bf16.mxu0 0
  %1468 = vmatmul.mubr.bf16.gmra.mrb[0].mxu0 %v1433
  %v1469 = vpop.f32.mrb[0].mxu0
  %v1470 = vadd.f32 0.0, %v1469
  %v1471 = vpop.f32.mrb[0].mxu0
  %v1472 = vpop.f32.mrb[0].mxu0
  %v1473 = vpop.f32.mrb[0].mxu0
  %1474 = vdwg.mxu0
  %v1475 = vadd.f32 %v1427, %v1470
  %v1476 = vxor.u32 %v1475, 2147483648
  %v1477 = vmul.f32 %v1476, 1.442695
  %v1478 = vpow.pop %v1477
  %v1479 = vadd.f32 %v1478, 1.0
  %v1480 = vrcp.pop %v1479
  %v1481 = vmul.f32 1.0, %v1480
  %v1482 = vtanh.pop %v1475
  %v1483 = vmul.f32 %v1481, %v1420
  %1485 = vrot.lane.b32.xlu0 %v1482, 64
  %v1486 = vpop.permute.xlu0 %1485
  %v1488 = vmul.f32 %v1481, %v1486
  %1490 = vrot.lane.b32.xlu0 %v1488, 32
  %v1491 = vpop.permute.xlu0 %1490
  %v1493 = vadd.f32 %v1483, %v1491
  %v1494 = vtanh.pop %v1493
  %1496 = vrot.lane.b32.xlu0 %v1494, 64
  %v1497 = vpop.permute.xlu0 %1496
  %v1499 = vmul.f32 %v1481, %v1497
  %v1500 = vld [vmem:[%s780] sm:$0xff]
  %v1501 = vpack.c.bf16 %v1499, %v1499
  %1503 = vrot.lane.b32.xlu0 %v1501, 32
  %v1504 = vpop.permute.xlu0 %1503
  %v1506 = vsel %vm226, %v1504, 0
  %1508 = vmatprep.subr.bf16.mxu0 0
  %1509 = vmatpush1.bf16.msra.mxu0 %v993
  %1510 = vmatprep.subr.bf16.mxu0 0
  %1511 = vmatpush1.bf16.msra.mxu0 %v994
  %1512 = vmatprep.subr.bf16.mxu0 0
  %1513 = vmatpush1.bf16.msra.mxu0 0
  %1514 = vmatprep.subr.bf16.mxu0 0
  %1515 = vmatpush1.bf16.msra.mxu0 0
  %1516 = vmatprep.subr.bf16.mxu0 0
  %1517 = vmatpush1.bf16.msra.mxu0 0
  %1518 = vmatprep.subr.bf16.mxu0 0
  %1519 = vmatpush1.bf16.msra.mxu0 0
  %1520 = vmatprep.subr.bf16.mxu0 0
  %1521 = vmatpush1.bf16.msra.mxu0 0
  %1522 = vmatprep.subr.bf16.mxu0 0
  %1523 = vmatpush1.bf16.msra.mxu0 0
  %1524 = vmatprep.subr.bf16.mxu0 0
  %1525 = vmatpush1.bf16.msra.mxu0 0
  %1526 = vmatprep.subr.bf16.mxu0 0
  %1527 = vmatpush1.bf16.msra.mxu0 0
  %1528 = vmatprep.subr.bf16.mxu0 0
  %1529 = vmatpush1.bf16.msra.mxu0 0
  %1530 = vmatprep.subr.bf16.mxu0 0
  %1531 = vmatpush1.bf16.msra.mxu0 0
  %1532 = vmatprep.subr.bf16.mxu0 0
  %1533 = vmatpush1.bf16.msra.mxu0 0
  %1534 = vmatprep.subr.bf16.mxu0 0
  %1535 = vmatpush1.bf16.msra.mxu0 0
  %1536 = vmatprep.subr.bf16.mxu0 0
  %1537 = vmatpush1.bf16.msra.mxu0 0
  %1538 = vmatprep.subr.bf16.mxu0 0
  %1539 = vmatpush1.bf16.msra.mxu0 0
  %1540 = vmatprep.mubr.bf16.mxu0 0
  %1541 = vmatmul.mubr.bf16.gmra.mrb[0].mxu0 %v1506
  %v1542 = vpop.f32.mrb[0].mxu0
  %v1543 = vadd.f32 0.0, %v1542
  %v1544 = vpop.f32.mrb[0].mxu0
  %v1545 = vpop.f32.mrb[0].mxu0
  %v1546 = vpop.f32.mrb[0].mxu0
  %1547 = vdwg.mxu0
  %v1548 = vadd.f32 %v1500, %v1543
  %v1549 = vxor.u32 %v1548, 2147483648
  %v1550 = vmul.f32 %v1549, 1.442695
  %v1551 = vpow.pop %v1550
  %v1552 = vadd.f32 %v1551, 1.0
  %v1553 = vrcp.pop %v1552
  %v1554 = vmul.f32 1.0, %v1553
  %v1555 = vtanh.pop %v1548
  %v1556 = vmul.f32 %v1554, %v1493
  %1558 = vrot.lane.b32.xlu0 %v1555, 64
  %v1559 = vpop.permute.xlu0 %1558
  %v1561 = vmul.f32 %v1554, %v1559
  %1563 = vrot.lane.b32.xlu0 %v1561, 32
  %v1564 = vpop.permute.xlu0 %1563
  %v1566 = vadd.f32 %v1556, %v1564
  %v1567 = vtanh.pop %v1566
  %1569 = vrot.lane.b32.xlu0 %v1567, 64
  %v1570 = vpop.permute.xlu0 %1569
  %v1572 = vmul.f32 %v1554, %v1570
  %v1573 = vpack.c.bf16 %v1572, %v1572
  %v1574 = vld [vmem:[%s7] sm:$0xf]
  %v1575 = vld [vmem:[%s7 + $0x4] sm:$0xf]
  %v1576 = vld [vmem:[%s7 + $0x8] sm:$0xf]
  %v1577 = vld [vmem:[%s7 + $0xc] sm:$0xf]
  %v1578 = vld [vmem:[%s8] sm:$0x1]
  %v1580 = vlaneseq
  %v1581 = vshrl.u32 %v1580, 7
  %v1582 = vsub.s32 0, %v1581
  %v1583 = vrot.slane %v1578, %v1582
  %1586 = vrot.lane.b32.xlu0 %v1573, 32
  %v1587 = vpop.permute.xlu0 %1586
  %v1592 = vunpack.c.l.b16 %v1574
  %v1593 = vunpack.c.l.b16 %v1575
  %v1594 = vunpack.c.l.b16 %v1576
  %v1595 = vunpack.c.l.b16 %v1577
  %v1596 = vpack.c.b16 %v1593, %v1592
  %v1597 = vpack.c.b16 %v1595, %v1594
  %v1601 = vsel %vm226, %v1587, 0
  %1603 = vmatprep.subr.bf16.mxu0 0
  %1604 = vmatpush1.bf16.msra.mxu0 %v1596
  %1605 = vmatprep.subr.bf16.mxu0 0
  %1606 = vmatpush1.bf16.msra.mxu0 %v1597
  %1607 = vmatprep.subr.bf16.mxu0 0
  %1608 = vmatpush1.bf16.msra.mxu0 0
  %1609 = vmatprep.subr.bf16.mxu0 0
  %1610 = vmatpush1.bf16.msra.mxu0 0
  %1611 = vmatprep.subr.bf16.mxu0 0
  %1612 = vmatpush1.bf16.msra.mxu0 0
  %1613 = vmatprep.subr.bf16.mxu0 0
  %1614 = vmatpush1.bf16.msra.mxu0 0
  %1615 = vmatprep.subr.bf16.mxu0 0
  %1616 = vmatpush1.bf16.msra.mxu0 0
  %1617 = vmatprep.subr.bf16.mxu0 0
  %1618 = vmatpush1.bf16.msra.mxu0 0
  %1619 = vmatprep.subr.bf16.mxu0 0
  %1620 = vmatpush1.bf16.msra.mxu0 0
  %1621 = vmatprep.subr.bf16.mxu0 0
  %1622 = vmatpush1.bf16.msra.mxu0 0
  %1623 = vmatprep.subr.bf16.mxu0 0
  %1624 = vmatpush1.bf16.msra.mxu0 0
  %1625 = vmatprep.subr.bf16.mxu0 0
  %1626 = vmatpush1.bf16.msra.mxu0 0
  %1627 = vmatprep.subr.bf16.mxu0 0
  %1628 = vmatpush1.bf16.msra.mxu0 0
  %1629 = vmatprep.subr.bf16.mxu0 0
  %1630 = vmatpush1.bf16.msra.mxu0 0
  %1631 = vmatprep.subr.bf16.mxu0 0
  %1632 = vmatpush1.bf16.msra.mxu0 0
  %1633 = vmatprep.subr.bf16.mxu0 0
  %1634 = vmatpush1.bf16.msra.mxu0 0
  %1635 = vmatprep.mubr.bf16.mxu0 0
  %1636 = vmatmul.mubr.bf16.gmra.mrb[0].mxu0 %v1601
  %v1637 = vpop.f32.mrb[0].mxu0
  %v1638 = vadd.f32 %v1583, %v1637
  %v1639 = vpop.f32.mrb[0].mxu0
  %v1640 = vpop.f32.mrb[0].mxu0
  %v1641 = vpop.f32.mrb[0].mxu0
  %1642 = vdwg.mxu0
  %1643 = vst [vmem:[%s9] sm:$0xff] %v1638
  // Predicated region
  $region38: #{lstm_model_forward.1} parent=0 // pred_check
    _
  $region39: #{lstm_model_forward.1} parent=0 // pred_check_branch
    %1645 = sbr.rel (0) target = $region41
  $region40: #{lstm_model_forward.1} parent=0 // pred_region
    _
  $region41: #{lstm_model_forward.1} parent=0 // pred_fallthru
    _
  // Predicated region
  $region42: #{lstm_model_forward.1} parent=0 // pred_check
    _
  $region43: #{lstm_model_forward.1} parent=0 // pred_check_branch
    %1647 = sbr.rel (0) target = $region45
  $region44: #{lstm_model_forward.1} parent=0 // pred_region
    _
  $region45: #{lstm_model_forward.1} parent=0 // pred_fallthru
    _

</llo_original>
